<compile_context>
chip_gen: v6e
topology: v6e:2x2x1
jax: 0.10.0
libtpu: 0.0.40
codegen_flags: <defaults>
</compile_context>

<pallas_src>
import functools

import jax
import jax.numpy as jnp
from jax.experimental import pallas as pl
from jax.experimental.pallas import tpu as pltpu

EPS = 1e-5
FLAT = 128        # L_out * C_out for every cell: 32*4, 16*8, 8*16, 4*32
NCELLS = 4


# ---------------------------------------------------------------------------
# Pallas kernel: the whole DeNoiseEnc (4 fused EncoderCells) for one batch row
# ---------------------------------------------------------------------------
def denoise_enc_kernel(x_ref, wt_ref, a_ref, b_ref, w2e_ref, vec_ref, out_ref):
    # x_ref   : (1, 1, FLAT)        flat input [l*C_in + ci], zero padded to 128 lanes
    # wt_ref  : (4, FLAT, FLAT)     Toeplitz conv matrices (zero-padded rows)
    # a_ref   : (4, FLAT, FLAT)     pos-path GAP+FC1(+BN1) folded matrix
    # b_ref   : (4, FLAT, FLAT)     neg-path GAP+FC1(+BN1) folded matrix
    # w2e_ref : (4, FLAT, FLAT)     FC2(+BN2) + channel->flat expansion folded matrix
    # vec_ref : (4, 8, FLAT)        rows: [conv bias, fc1 bias, fc2 bias, bn scale, bn bias]
    # out_ref : (1, 4, FLAT)        per-cell flat outputs
    x = x_ref[0]                                          # (1, FLAT)
    for i in range(NCELLS):
        wt = wt_ref[i]                                    # (FLAT, FLAT)
        a = a_ref[i]
        b = b_ref[i]
        w2e = w2e_ref[i]
        vec = vec_ref[i]                                  # (8, FLAT)

        # Conv1d (stride 2, zero padding) as one lane-dense matmul.
        z = jnp.dot(x, wt, preferred_element_type=jnp.float32) + vec[0:1, :]

        # APReLU: GAP + FC1 + BN1 folded into A/B, FC2 + BN2 + expansion into W2E.
        pos = jnp.maximum(z, 0.0)
        neg = jnp.minimum(z, 0.0)
        h = jnp.dot(pos, a, preferred_element_type=jnp.float32)
        h = h + jnp.dot(neg, b, preferred_element_type=jnp.float32)
        h = jnp.maximum(h + vec[1:2, :], 0.0)
        coeff = jax.nn.sigmoid(
            jnp.dot(h, w2e, preferred_element_type=jnp.float32) + vec[2:3, :])

        # APReLU output followed by the final (eval-mode, folded) BatchNorm1d.
        y = (pos + coeff * neg) * vec[3:4, :] + vec[4:5, :]

        out_ref[:, i:i + 1, :] = y.reshape(1, 1, FLAT).astype(out_ref.dtype)
        x = y                                             # feeds the next cell


# ---------------------------------------------------------------------------
# Parameter folding / packing (pure JAX, done once)
# ---------------------------------------------------------------------------
def _conv_toeplitz(w, l_in, l_out, pad, stride):
    """Dense (l_in*c_in, l_out*c_out) matrix equivalent to the padded, strided conv."""
    c_out, c_in, k = w.shape
    j = jnp.arange(l_in)
    l = jnp.arange(l_out)
    kk = j[:, None] + pad - stride * l[None, :]           # (l_in, l_out) -> kernel tap
    valid = (kk >= 0) & (kk < k)
    wk = jnp.transpose(w, (2, 1, 0))                      # (k, c_in, c_out)
    g = wk[jnp.clip(kk, 0, k - 1)]                        # (l_in, l_out, c_in, c_out)
    g = jnp.where(valid[:, :, None, None], g, 0.0)
    g = jnp.transpose(g, (0, 2, 1, 3))                    # (l_in, c_in, l_out, c_out)
    return g.reshape(l_in * c_in, l_out * c_out)


def pack_params(params_list, kernels, paddings, c_in0, l0, stride=2):
    wts, amats, bmats, w2es, vecs, dims = [], [], [], [], [], []
    c_in, l_in = c_in0, l0
    for p, k, pad in zip(params_list, kernels, paddings):
        c_out = p['wconv'].shape[0]
        l_out = (l_in + 2 * pad - k) // stride + 1
        assert l_out * c_out == FLAT, "flat activation size must equal 128"
        assert l_in * c_in <= FLAT, "flat input size must fit in 128 lanes"

        # Conv weights -> padded Toeplitz matrix.
        wt = _conv_toeplitz(p['wconv'].astype(jnp.float32), l_in, l_out, pad, stride)
        wts.append(jnp.pad(wt, ((0, FLAT - l_in * c_in), (0, 0))))

        # FC1 with BatchNorm1d(2C) folded; GAP (mean over L) folded into the matrix.
        w1 = p['fc1_w'] * p['bn1_s']                      # (2C, 2C)
        b1 = p['fc1_b'] * p['bn1_s'] + p['bn1_b']         # (1, 2C)
        a = jnp.tile(w1[:c_out, :], (l_out, 1)) / l_out   # (FLAT, 2C)
        bm = jnp.tile(w1[c_out:, :], (l_out, 1)) / l_out
        amats.append(jnp.pad(a, ((0, 0), (0, FLAT - 2 * c_out))))
        bmats.append(jnp.pad(bm, ((0, 0), (0, FLAT - 2 * c_out))))

        # FC2 with BatchNorm1d(C) folded; sigmoid-gate channel->flat expansion folded in.
        w2 = p['fc2_w'] * p['bn2_s']                      # (2C, C)
        b2 = p['fc2_b'] * p['bn2_s'] + p['bn2_b']         # (1, C)
        w2es.append(jnp.pad(jnp.tile(w2, (1, l_out)),
                            ((0, FLAT - 2 * c_out), (0, 0))))

        vec = jnp.concatenate([
            jnp.tile(p['bconv'], (1, l_out)),                       # conv bias (expanded)
            jnp.pad(b1, ((0, 0), (0, FLAT - 2 * c_out))),           # fc1+bn1 bias
            jnp.tile(b2, (1, l_out)),                               # fc2+bn2 bias (expanded)
            jnp.tile(p['bno_s'], (1, l_out)),                       # output BN scale
            jnp.tile(p['bno_b'], (1, l_out)),                       # output BN bias
            jnp.zeros((3, FLAT), jnp.float32),
        ], axis=0)                                                  # (8, FLAT)
        vecs.append(vec)

        dims.append((c_out, l_out))
        c_in, l_in = c_out, l_out

    packed = (jnp.stack(wts), jnp.stack(amats), jnp.stack(bmats),
              jnp.stack(w2es), jnp.stack(vecs))
    return packed, tuple(dims)


# ---------------------------------------------------------------------------
# Wrapper: single fused pallas_call + thin layout glue
# ---------------------------------------------------------------------------
@functools.partial(jax.jit, static_argnums=(2,))
def denoise_enc(x, packed, dims):
    wt, a, b, w2e, vec = packed
    n, c_in, l_in = x.shape

    x_flat = jnp.transpose(x, (0, 2, 1)).reshape(n, l_in * c_in)
    x_flat = jnp.pad(x_flat, ((0, 0), (0, FLAT - l_in * c_in)))
    x_flat = x_flat.reshape(n, 1, FLAT).astype(jnp.float32)

    const = lambda i: (0, 0, 0)
    out = pl.pallas_call(
        denoise_enc_kernel,
        out_shape=jax.ShapeDtypeStruct((n, NCELLS, FLAT), jnp.float32),
        grid=(n,),
        in_specs=[
            pl.BlockSpec((1, 1, FLAT), lambda i: (i, 0, 0)),        # x (per-sample)
            pl.BlockSpec((NCELLS, FLAT, FLAT), const),              # Toeplitz conv
            pl.BlockSpec((NCELLS, FLAT, FLAT), const),              # A (pos path)
            pl.BlockSpec((NCELLS, FLAT, FLAT), const),              # B (neg path)
            pl.BlockSpec((NCELLS, FLAT, FLAT), const),              # W2E
            pl.BlockSpec((NCELLS, 8, FLAT), const),                 # packed vectors
        ],
        out_specs=pl.BlockSpec((1, NCELLS, FLAT), lambda i: (i, 0, 0)),
        compiler_params=pltpu.CompilerParams(dimension_semantics=("parallel",)),
    )(x_flat, wt, a, b, w2e, vec)

    outs = []
    for i, (c_out, l_out) in enumerate(dims):
        outs.append(out[:, i, :].reshape(n, l_out, c_out).transpose(0, 2, 1))  # NCL
    return outs


# ---------------------------------------------------------------------------
# Deterministic parameter construction (synthetic, no checkpoint)
# ---------------------------------------------------------------------------
def _bn_fold(keys, n):
    kg, kb, km, kv = keys
    gamma = 1.0 + 0.1 * jax.random.normal(kg, (n,))
    beta = 0.1 * jax.random.normal(kb, (n,))
    mean = 0.05 * jax.random.normal(km, (n,))
    var = 1.0 + 0.1 * jnp.abs(jax.random.normal(kv, (n,)))
    s = gamma / jnp.sqrt(var + EPS)
    b = beta - mean * s
    return (s.reshape(1, n).astype(jnp.float32),
            b.reshape(1, n).astype(jnp.float32))


def init_cell_params(key, in_ch, out_ch, K):
    ks = jax.random.split(key, 16)
    p = {}
    p['wconv'] = (0.2 * jax.random.normal(ks[0], (out_ch, in_ch, K))).astype(jnp.float32)
    p['bconv'] = (0.1 * jax.random.normal(ks[1], (1, out_ch))).astype(jnp.float32)
    # nn.Linear weights stored pre-transposed to (in_features, out_features)
    p['fc1_w'] = (0.2 * jax.random.normal(ks[2], (2 * out_ch, 2 * out_ch))).astype(jnp.float32)
    p['fc1_b'] = (0.1 * jax.random.normal(ks[3], (1, 2 * out_ch))).astype(jnp.float32)
    p['bn1_s'], p['bn1_b'] = _bn_fold(ks[4:8], 2 * out_ch)
    p['fc2_w'] = (0.2 * jax.random.normal(ks[8], (2 * out_ch, out_ch))).astype(jnp.float32)
    p['fc2_b'] = (0.1 * jax.random.normal(ks[9], (1, out_ch))).astype(jnp.float32)
    p['bn2_s'], p['bn2_b'] = _bn_fold(ks[10:14], out_ch)
    p['bno_s'], p['bno_b'] = _bn_fold(jax.random.split(ks[14], 4), out_ch)
    return p


# ---------------------------------------------------------------------------
# Pure-JAX reference (for correctness check)
# ---------------------------------------------------------------------------
def ref_cell(x, p, K, pad, stride=2):
    y = jax.lax.conv_general_dilated(x, p['wconv'], (stride,), [(pad, pad)],
                                     dimension_numbers=('NCH', 'OIH', 'NCH'))
    y = y + p['bconv'][0][None, :, None]
    pos = jnp.maximum(y, 0.0)
    neg = jnp.minimum(y, 0.0)
    cat = jnp.concatenate([pos.mean(-1), neg.mean(-1)], axis=1)
    h = cat @ p['fc1_w'] + p['fc1_b']
    h = h * p['bn1_s'] + p['bn1_b']
    h = jnp.maximum(h, 0.0)
    h = h @ p['fc2_w'] + p['fc2_b']
    h = h * p['bn2_s'] + p['bn2_b']
    coeff = jax.nn.sigmoid(h)
    out = pos + coeff[:, :, None] * neg
    out = out * p['bno_s'][0][None, :, None] + p['bno_b'][0][None, :, None]
    return out


if __name__ == "__main__":
    key = jax.random.PRNGKey(0)

    conv_kernel = [17, 17, 3, 3]
    paddingsize = [8, 8, 1, 1]
    out_channels = [4, 8, 16, 32]

    # input: (N=2, C_in=1, L=64)  -- NCL, same as PyTorch Conv1d
    k_x, k_p = jax.random.split(key)
    x = jax.random.normal(k_x, (2, 1, 64), dtype=jnp.float32)

    params_list = []
    in_ch = x.shape[1]
    pkeys = jax.random.split(k_p, 4)
    for i in range(4):
        params_list.append(init_cell_params(pkeys[i], in_ch, out_channels[i],
                                            conv_kernel[i]))
        in_ch = out_channels[i]

    packed, dims = pack_params(params_list, conv_kernel, paddingsize,
                               c_in0=x.shape[1], l0=x.shape[2])

    outs = denoise_enc(x, packed, dims)
    outs = [jax.block_until_ready(o) for o in outs]

    # correctness check against pure-JAX reference
    xr = x
    for i, (p, K, pad) in enumerate(zip(params_list, conv_kernel, paddingsize)):
        xr = ref_cell(xr, p, K, pad)
        assert outs[i].shape == xr.shape, (outs[i].shape, xr.shape)
        err = float(jnp.max(jnp.abs(outs[i] - xr)))
        assert err < 2e-2, f"cell {i} mismatch: max abs err {err}"

    print("KERNEL_OK")
</pallas_src>

<mosaic_0001>
module attributes {stable_mosaic.version = 11 : i64} {
  func.func @denoise_enc_kernel(%arg0: i32, %arg1: memref<1x1x128xf32, #tpu.memory_space<vmem>>, %arg2: memref<4x128x128xf32, #tpu.memory_space<vmem>>, %arg3: memref<4x128x128xf32, #tpu.memory_space<vmem>>, %arg4: memref<4x128x128xf32, #tpu.memory_space<vmem>>, %arg5: memref<4x128x128xf32, #tpu.memory_space<vmem>>, %arg6: memref<4x8x128xf32, #tpu.memory_space<vmem>>, %arg7: memref<1x4x128xf32, #tpu.memory_space<vmem>>) attributes {dimension_semantics = [#tpu.dimension_semantics<parallel>], iteration_bounds = array<i64: 2>, scalar_prefetch = 0 : i64, scratch_operands = 0 : i64, tpu.core_type = #tpu.core_type<tc>, window_params = [{transform_indices = @transform_0, window_bounds = array<i64: 1, 1, 128>}, {pipeline_mode = #tpu.pipeline_mode<synchronous>, transform_indices = @transform_1, window_bounds = array<i64: 4, 128, 128>}, {pipeline_mode = #tpu.pipeline_mode<synchronous>, transform_indices = @transform_2, window_bounds = array<i64: 4, 128, 128>}, {pipeline_mode = #tpu.pipeline_mode<synchronous>, transform_indices = @transform_3, window_bounds = array<i64: 4, 128, 128>}, {pipeline_mode = #tpu.pipeline_mode<synchronous>, transform_indices = @transform_4, window_bounds = array<i64: 4, 128, 128>}, {pipeline_mode = #tpu.pipeline_mode<synchronous>, transform_indices = @transform_5, window_bounds = array<i64: 4, 8, 128>}, {transform_indices = @transform_6, window_bounds = array<i64: 1, 4, 128>}]} {
    %c0 = arith.constant 0 : index
    %c0_0 = arith.constant 0 : index
    %c0_1 = arith.constant 0 : index
    %0 = vector.load %arg1[%c0, %c0_0, %c0_1] : memref<1x1x128xf32, #tpu.memory_space<vmem>>, vector<1x1x128xf32>
    %1 = vector.shape_cast %0 : vector<1x1x128xf32> to vector<1x128xf32>
    %c0_2 = arith.constant 0 : index
    %c0_3 = arith.constant 0 : index
    %c0_4 = arith.constant 0 : index
    %2 = vector.load %arg2[%c0_2, %c0_3, %c0_4] : memref<4x128x128xf32, #tpu.memory_space<vmem>>, vector<1x128x128xf32>
    %3 = vector.shape_cast %2 : vector<1x128x128xf32> to vector<128x128xf32>
    %c0_5 = arith.constant 0 : index
    %c0_6 = arith.constant 0 : index
    %c0_7 = arith.constant 0 : index
    %4 = vector.load %arg3[%c0_5, %c0_6, %c0_7] : memref<4x128x128xf32, #tpu.memory_space<vmem>>, vector<1x128x128xf32>
    %5 = vector.shape_cast %4 : vector<1x128x128xf32> to vector<128x128xf32>
    %c0_8 = arith.constant 0 : index
    %c0_9 = arith.constant 0 : index
    %c0_10 = arith.constant 0 : index
    %6 = vector.load %arg4[%c0_8, %c0_9, %c0_10] : memref<4x128x128xf32, #tpu.memory_space<vmem>>, vector<1x128x128xf32>
    %7 = vector.shape_cast %6 : vector<1x128x128xf32> to vector<128x128xf32>
    %c0_11 = arith.constant 0 : index
    %c0_12 = arith.constant 0 : index
    %c0_13 = arith.constant 0 : index
    %8 = vector.load %arg5[%c0_11, %c0_12, %c0_13] : memref<4x128x128xf32, #tpu.memory_space<vmem>>, vector<1x128x128xf32>
    %9 = vector.shape_cast %8 : vector<1x128x128xf32> to vector<128x128xf32>
    %c0_14 = arith.constant 0 : index
    %c0_15 = arith.constant 0 : index
    %c0_16 = arith.constant 0 : index
    %10 = vector.load %arg6[%c0_14, %c0_15, %c0_16] : memref<4x8x128xf32, #tpu.memory_space<vmem>>, vector<1x8x128xf32>
    %11 = vector.shape_cast %10 : vector<1x8x128xf32> to vector<8x128xf32>
    %cst = arith.constant dense<0.000000e+00> : vector<1x128xf32>
    %12 = tpu.matmul %1, %3, %cst {dimension_numbers = #tpu.dot_dimension_numbers<[1], [0], [0], [1], [0, 0, 1, 1], [], []>} : vector<1x128xf32>, vector<128x128xf32>, vector<1x128xf32> -> vector<1x128xf32>
    %13 = vector.extract_strided_slice %11 {offsets = [0, 0], sizes = [1, 128], strides = [1, 1]} : vector<8x128xf32> to vector<1x128xf32>
    %14 = arith.addf %12, %13 : vector<1x128xf32>
    %cst_17 = arith.constant 0.000000e+00 : f32
    %15 = vector.broadcast %cst_17 : f32 to vector<1x128xf32>
    %16 = arith.maximumf %14, %15 : vector<1x128xf32>
    %cst_18 = arith.constant 0.000000e+00 : f32
    %17 = vector.broadcast %cst_18 : f32 to vector<1x128xf32>
    %18 = arith.minimumf %14, %17 : vector<1x128xf32>
    %cst_19 = arith.constant dense<0.000000e+00> : vector<1x128xf32>
    %19 = tpu.matmul %16, %5, %cst_19 {dimension_numbers = #tpu.dot_dimension_numbers<[1], [0], [0], [1], [0, 0, 1, 1], [], []>} : vector<1x128xf32>, vector<128x128xf32>, vector<1x128xf32> -> vector<1x128xf32>
    %cst_20 = arith.constant dense<0.000000e+00> : vector<1x128xf32>
    %20 = tpu.matmul %18, %7, %cst_20 {dimension_numbers = #tpu.dot_dimension_numbers<[1], [0], [0], [1], [0, 0, 1, 1], [], []>} : vector<1x128xf32>, vector<128x128xf32>, vector<1x128xf32> -> vector<1x128xf32>
    %21 = arith.addf %19, %20 : vector<1x128xf32>
    %22 = vector.extract_strided_slice %11 {offsets = [1, 0], sizes = [1, 128], strides = [1, 1]} : vector<8x128xf32> to vector<1x128xf32>
    %23 = arith.addf %21, %22 : vector<1x128xf32>
    %cst_21 = arith.constant 0.000000e+00 : f32
    %24 = vector.broadcast %cst_21 : f32 to vector<1x128xf32>
    %25 = arith.maximumf %23, %24 : vector<1x128xf32>
    %cst_22 = arith.constant dense<0.000000e+00> : vector<1x128xf32>
    %26 = tpu.matmul %25, %9, %cst_22 {dimension_numbers = #tpu.dot_dimension_numbers<[1], [0], [0], [1], [0, 0, 1, 1], [], []>} : vector<1x128xf32>, vector<128x128xf32>, vector<1x128xf32> -> vector<1x128xf32>
    %27 = vector.extract_strided_slice %11 {offsets = [2, 0], sizes = [1, 128], strides = [1, 1]} : vector<8x128xf32> to vector<1x128xf32>
    %28 = arith.addf %26, %27 : vector<1x128xf32>
    %29 = arith.negf %28 : vector<1x128xf32>
    %30 = math.exp %29 : vector<1x128xf32>
    %cst_23 = arith.constant 1.000000e+00 : f32
    %31 = vector.broadcast %cst_23 : f32 to vector<1x128xf32>
    %32 = arith.addf %31, %30 : vector<1x128xf32>
    %33 = arith.divf %31, %32 : vector<1x128xf32>
    %34 = arith.mulf %33, %18 : vector<1x128xf32>
    %35 = arith.addf %16, %34 : vector<1x128xf32>
    %36 = vector.extract_strided_slice %11 {offsets = [3, 0], sizes = [1, 128], strides = [1, 1]} : vector<8x128xf32> to vector<1x128xf32>
    %37 = arith.mulf %35, %36 : vector<1x128xf32>
    %38 = vector.extract_strided_slice %11 {offsets = [4, 0], sizes = [1, 128], strides = [1, 1]} : vector<8x128xf32> to vector<1x128xf32>
    %39 = arith.addf %37, %38 : vector<1x128xf32>
    %40 = vector.shape_cast %39 : vector<1x128xf32> to vector<1x1x128xf32>
    %c0_24 = arith.constant 0 : index
    %c0_25 = arith.constant 0 : index
    %c0_26 = arith.constant 0 : index
    %41 = vector.load %arg7[%c0_24, %c0_25, %c0_26] : memref<1x4x128xf32, #tpu.memory_space<vmem>>, vector<1x1x128xf32>
    tpu.vector_store %arg7[%c0_24, %c0_25, %c0_26], %40 {strides = array<i32>} : memref<1x4x128xf32, #tpu.memory_space<vmem>>, vector<1x1x128xf32>,
    %c1 = arith.constant 1 : index
    %c0_27 = arith.constant 0 : index
    %c0_28 = arith.constant 0 : index
    %42 = vector.load %arg2[%c1, %c0_27, %c0_28] : memref<4x128x128xf32, #tpu.memory_space<vmem>>, vector<1x128x128xf32>
    %43 = vector.shape_cast %42 : vector<1x128x128xf32> to vector<128x128xf32>
    %c1_29 = arith.constant 1 : index
    %c0_30 = arith.constant 0 : index
    %c0_31 = arith.constant 0 : index
    %44 = vector.load %arg3[%c1_29, %c0_30, %c0_31] : memref<4x128x128xf32, #tpu.memory_space<vmem>>, vector<1x128x128xf32>
    %45 = vector.shape_cast %44 : vector<1x128x128xf32> to vector<128x128xf32>
    %c1_32 = arith.constant 1 : index
    %c0_33 = arith.constant 0 : index
    %c0_34 = arith.constant 0 : index
    %46 = vector.load %arg4[%c1_32, %c0_33, %c0_34] : memref<4x128x128xf32, #tpu.memory_space<vmem>>, vector<1x128x128xf32>
    %47 = vector.shape_cast %46 : vector<1x128x128xf32> to vector<128x128xf32>
    %c1_35 = arith.constant 1 : index
    %c0_36 = arith.constant 0 : index
    %c0_37 = arith.constant 0 : index
    %48 = vector.load %arg5[%c1_35, %c0_36, %c0_37] : memref<4x128x128xf32, #tpu.memory_space<vmem>>, vector<1x128x128xf32>
    %49 = vector.shape_cast %48 : vector<1x128x128xf32> to vector<128x128xf32>
    %c1_38 = arith.constant 1 : index
    %c0_39 = arith.constant 0 : index
    %c0_40 = arith.constant 0 : index
    %50 = vector.load %arg6[%c1_38, %c0_39, %c0_40] : memref<4x8x128xf32, #tpu.memory_space<vmem>>, vector<1x8x128xf32>
    %51 = vector.shape_cast %50 : vector<1x8x128xf32> to vector<8x128xf32>
    %cst_41 = arith.constant dense<0.000000e+00> : vector<1x128xf32>
    %52 = tpu.matmul %39, %43, %cst_41 {dimension_numbers = #tpu.dot_dimension_numbers<[1], [0], [0], [1], [0, 0, 1, 1], [], []>} : vector<1x128xf32>, vector<128x128xf32>, vector<1x128xf32> -> vector<1x128xf32>
    %53 = vector.extract_strided_slice %51 {offsets = [0, 0], sizes = [1, 128], strides = [1, 1]} : vector<8x128xf32> to vector<1x128xf32>
    %54 = arith.addf %52, %53 : vector<1x128xf32>
    %cst_42 = arith.constant 0.000000e+00 : f32
    %55 = vector.broadcast %cst_42 : f32 to vector<1x128xf32>
    %56 = arith.maximumf %54, %55 : vector<1x128xf32>
    %cst_43 = arith.constant 0.000000e+00 : f32
    %57 = vector.broadcast %cst_43 : f32 to vector<1x128xf32>
    %58 = arith.minimumf %54, %57 : vector<1x128xf32>
    %cst_44 = arith.constant dense<0.000000e+00> : vector<1x128xf32>
    %59 = tpu.matmul %56, %45, %cst_44 {dimension_numbers = #tpu.dot_dimension_numbers<[1], [0], [0], [1], [0, 0, 1, 1], [], []>} : vector<1x128xf32>, vector<128x128xf32>, vector<1x128xf32> -> vector<1x128xf32>
    %cst_45 = arith.constant dense<0.000000e+00> : vector<1x128xf32>
    %60 = tpu.matmul %58, %47, %cst_45 {dimension_numbers = #tpu.dot_dimension_numbers<[1], [0], [0], [1], [0, 0, 1, 1], [], []>} : vector<1x128xf32>, vector<128x128xf32>, vector<1x128xf32> -> vector<1x128xf32>
    %61 = arith.addf %59, %60 : vector<1x128xf32>
    %62 = vector.extract_strided_slice %51 {offsets = [1, 0], sizes = [1, 128], strides = [1, 1]} : vector<8x128xf32> to vector<1x128xf32>
    %63 = arith.addf %61, %62 : vector<1x128xf32>
    %cst_46 = arith.constant 0.000000e+00 : f32
    %64 = vector.broadcast %cst_46 : f32 to vector<1x128xf32>
    %65 = arith.maximumf %63, %64 : vector<1x128xf32>
    %cst_47 = arith.constant dense<0.000000e+00> : vector<1x128xf32>
    %66 = tpu.matmul %65, %49, %cst_47 {dimension_numbers = #tpu.dot_dimension_numbers<[1], [0], [0], [1], [0, 0, 1, 1], [], []>} : vector<1x128xf32>, vector<128x128xf32>, vector<1x128xf32> -> vector<1x128xf32>
    %67 = vector.extract_strided_slice %51 {offsets = [2, 0], sizes = [1, 128], strides = [1, 1]} : vector<8x128xf32> to vector<1x128xf32>
    %68 = arith.addf %66, %67 : vector<1x128xf32>
    %69 = arith.negf %68 : vector<1x128xf32>
    %70 = math.exp %69 : vector<1x128xf32>
    %cst_48 = arith.constant 1.000000e+00 : f32
    %71 = vector.broadcast %cst_48 : f32 to vector<1x128xf32>
    %72 = arith.addf %71, %70 : vector<1x128xf32>
    %73 = arith.divf %71, %72 : vector<1x128xf32>
    %74 = arith.mulf %73, %58 : vector<1x128xf32>
    %75 = arith.addf %56, %74 : vector<1x128xf32>
    %76 = vector.extract_strided_slice %51 {offsets = [3, 0], sizes = [1, 128], strides = [1, 1]} : vector<8x128xf32> to vector<1x128xf32>
    %77 = arith.mulf %75, %76 : vector<1x128xf32>
    %78 = vector.extract_strided_slice %51 {offsets = [4, 0], sizes = [1, 128], strides = [1, 1]} : vector<8x128xf32> to vector<1x128xf32>
    %79 = arith.addf %77, %78 : vector<1x128xf32>
    %80 = vector.shape_cast %79 : vector<1x128xf32> to vector<1x1x128xf32>
    %c0_49 = arith.constant 0 : index
    %c1_50 = arith.constant 1 : index
    %c0_51 = arith.constant 0 : index
    %81 = vector.load %arg7[%c0_49, %c1_50, %c0_51] : memref<1x4x128xf32, #tpu.memory_space<vmem>>, vector<1x1x128xf32>
    tpu.vector_store %arg7[%c0_49, %c1_50, %c0_51], %80 {strides = array<i32>} : memref<1x4x128xf32, #tpu.memory_space<vmem>>, vector<1x1x128xf32>,
    %c2 = arith.constant 2 : index
    %c0_52 = arith.constant 0 : index
    %c0_53 = arith.constant 0 : index
    %82 = vector.load %arg2[%c2, %c0_52, %c0_53] : memref<4x128x128xf32, #tpu.memory_space<vmem>>, vector<1x128x128xf32>
    %83 = vector.shape_cast %82 : vector<1x128x128xf32> to vector<128x128xf32>
    %c2_54 = arith.constant 2 : index
    %c0_55 = arith.constant 0 : index
    %c0_56 = arith.constant 0 : index
    %84 = vector.load %arg3[%c2_54, %c0_55, %c0_56] : memref<4x128x128xf32, #tpu.memory_space<vmem>>, vector<1x128x128xf32>
    %85 = vector.shape_cast %84 : vector<1x128x128xf32> to vector<128x128xf32>
    %c2_57 = arith.constant 2 : index
    %c0_58 = arith.constant 0 : index
    %c0_59 = arith.constant 0 : index
    %86 = vector.load %arg4[%c2_57, %c0_58, %c0_59] : memref<4x128x128xf32, #tpu.memory_space<vmem>>, vector<1x128x128xf32>
    %87 = vector.shape_cast %86 : vector<1x128x128xf32> to vector<128x128xf32>
    %c2_60 = arith.constant 2 : index
    %c0_61 = arith.constant 0 : index
    %c0_62 = arith.constant 0 : index
    %88 = vector.load %arg5[%c2_60, %c0_61, %c0_62] : memref<4x128x128xf32, #tpu.memory_space<vmem>>, vector<1x128x128xf32>
    %89 = vector.shape_cast %88 : vector<1x128x128xf32> to vector<128x128xf32>
    %c2_63 = arith.constant 2 : index
    %c0_64 = arith.constant 0 : index
    %c0_65 = arith.constant 0 : index
    %90 = vector.load %arg6[%c2_63, %c0_64, %c0_65] : memref<4x8x128xf32, #tpu.memory_space<vmem>>, vector<1x8x128xf32>
    %91 = vector.shape_cast %90 : vector<1x8x128xf32> to vector<8x128xf32>
    %cst_66 = arith.constant dense<0.000000e+00> : vector<1x128xf32>
    %92 = tpu.matmul %79, %83, %cst_66 {dimension_numbers = #tpu.dot_dimension_numbers<[1], [0], [0], [1], [0, 0, 1, 1], [], []>} : vector<1x128xf32>, vector<128x128xf32>, vector<1x128xf32> -> vector<1x128xf32>
    %93 = vector.extract_strided_slice %91 {offsets = [0, 0], sizes = [1, 128], strides = [1, 1]} : vector<8x128xf32> to vector<1x128xf32>
    %94 = arith.addf %92, %93 : vector<1x128xf32>
    %cst_67 = arith.constant 0.000000e+00 : f32
    %95 = vector.broadcast %cst_67 : f32 to vector<1x128xf32>
    %96 = arith.maximumf %94, %95 : vector<1x128xf32>
    %cst_68 = arith.constant 0.000000e+00 : f32
    %97 = vector.broadcast %cst_68 : f32 to vector<1x128xf32>
    %98 = arith.minimumf %94, %97 : vector<1x128xf32>
    %cst_69 = arith.constant dense<0.000000e+00> : vector<1x128xf32>
    %99 = tpu.matmul %96, %85, %cst_69 {dimension_numbers = #tpu.dot_dimension_numbers<[1], [0], [0], [1], [0, 0, 1, 1], [], []>} : vector<1x128xf32>, vector<128x128xf32>, vector<1x128xf32> -> vector<1x128xf32>
    %cst_70 = arith.constant dense<0.000000e+00> : vector<1x128xf32>
    %100 = tpu.matmul %98, %87, %cst_70 {dimension_numbers = #tpu.dot_dimension_numbers<[1], [0], [0], [1], [0, 0, 1, 1], [], []>} : vector<1x128xf32>, vector<128x128xf32>, vector<1x128xf32> -> vector<1x128xf32>
    %101 = arith.addf %99, %100 : vector<1x128xf32>
    %102 = vector.extract_strided_slice %91 {offsets = [1, 0], sizes = [1, 128], strides = [1, 1]} : vector<8x128xf32> to vector<1x128xf32>
    %103 = arith.addf %101, %102 : vector<1x128xf32>
    %cst_71 = arith.constant 0.000000e+00 : f32
    %104 = vector.broadcast %cst_71 : f32 to vector<1x128xf32>
    %105 = arith.maximumf %103, %104 : vector<1x128xf32>
    %cst_72 = arith.constant dense<0.000000e+00> : vector<1x128xf32>
    %106 = tpu.matmul %105, %89, %cst_72 {dimension_numbers = #tpu.dot_dimension_numbers<[1], [0], [0], [1], [0, 0, 1, 1], [], []>} : vector<1x128xf32>, vector<128x128xf32>, vector<1x128xf32> -> vector<1x128xf32>
    %107 = vector.extract_strided_slice %91 {offsets = [2, 0], sizes = [1, 128], strides = [1, 1]} : vector<8x128xf32> to vector<1x128xf32>
    %108 = arith.addf %106, %107 : vector<1x128xf32>
    %109 = arith.negf %108 : vector<1x128xf32>
    %110 = math.exp %109 : vector<1x128xf32>
    %cst_73 = arith.constant 1.000000e+00 : f32
    %111 = vector.broadcast %cst_73 : f32 to vector<1x128xf32>
    %112 = arith.addf %111, %110 : vector<1x128xf32>
    %113 = arith.divf %111, %112 : vector<1x128xf32>
    %114 = arith.mulf %113, %98 : vector<1x128xf32>
    %115 = arith.addf %96, %114 : vector<1x128xf32>
    %116 = vector.extract_strided_slice %91 {offsets = [3, 0], sizes = [1, 128], strides = [1, 1]} : vector<8x128xf32> to vector<1x128xf32>
    %117 = arith.mulf %115, %116 : vector<1x128xf32>
    %118 = vector.extract_strided_slice %91 {offsets = [4, 0], sizes = [1, 128], strides = [1, 1]} : vector<8x128xf32> to vector<1x128xf32>
    %119 = arith.addf %117, %118 : vector<1x128xf32>
    %120 = vector.shape_cast %119 : vector<1x128xf32> to vector<1x1x128xf32>
    %c0_74 = arith.constant 0 : index
    %c2_75 = arith.constant 2 : index
    %c0_76 = arith.constant 0 : index
    %121 = vector.load %arg7[%c0_74, %c2_75, %c0_76] : memref<1x4x128xf32, #tpu.memory_space<vmem>>, vector<1x1x128xf32>
    tpu.vector_store %arg7[%c0_74, %c2_75, %c0_76], %120 {strides = array<i32>} : memref<1x4x128xf32, #tpu.memory_space<vmem>>, vector<1x1x128xf32>,
    %c3 = arith.constant 3 : index
    %c0_77 = arith.constant 0 : index
    %c0_78 = arith.constant 0 : index
    %122 = vector.load %arg2[%c3, %c0_77, %c0_78] : memref<4x128x128xf32, #tpu.memory_space<vmem>>, vector<1x128x128xf32>
    %123 = vector.shape_cast %122 : vector<1x128x128xf32> to vector<128x128xf32>
    %c3_79 = arith.constant 3 : index
    %c0_80 = arith.constant 0 : index
    %c0_81 = arith.constant 0 : index
    %124 = vector.load %arg3[%c3_79, %c0_80, %c0_81] : memref<4x128x128xf32, #tpu.memory_space<vmem>>, vector<1x128x128xf32>
    %125 = vector.shape_cast %124 : vector<1x128x128xf32> to vector<128x128xf32>
    %c3_82 = arith.constant 3 : index
    %c0_83 = arith.constant 0 : index
    %c0_84 = arith.constant 0 : index
    %126 = vector.load %arg4[%c3_82, %c0_83, %c0_84] : memref<4x128x128xf32, #tpu.memory_space<vmem>>, vector<1x128x128xf32>
    %127 = vector.shape_cast %126 : vector<1x128x128xf32> to vector<128x128xf32>
    %c3_85 = arith.constant 3 : index
    %c0_86 = arith.constant 0 : index
    %c0_87 = arith.constant 0 : index
    %128 = vector.load %arg5[%c3_85, %c0_86, %c0_87] : memref<4x128x128xf32, #tpu.memory_space<vmem>>, vector<1x128x128xf32>
    %129 = vector.shape_cast %128 : vector<1x128x128xf32> to vector<128x128xf32>
    %c3_88 = arith.constant 3 : index
    %c0_89 = arith.constant 0 : index
    %c0_90 = arith.constant 0 : index
    %130 = vector.load %arg6[%c3_88, %c0_89, %c0_90] : memref<4x8x128xf32, #tpu.memory_space<vmem>>, vector<1x8x128xf32>
    %131 = vector.shape_cast %130 : vector<1x8x128xf32> to vector<8x128xf32>
    %cst_91 = arith.constant dense<0.000000e+00> : vector<1x128xf32>
    %132 = tpu.matmul %119, %123, %cst_91 {dimension_numbers = #tpu.dot_dimension_numbers<[1], [0], [0], [1], [0, 0, 1, 1], [], []>} : vector<1x128xf32>, vector<128x128xf32>, vector<1x128xf32> -> vector<1x128xf32>
    %133 = vector.extract_strided_slice %131 {offsets = [0, 0], sizes = [1, 128], strides = [1, 1]} : vector<8x128xf32> to vector<1x128xf32>
    %134 = arith.addf %132, %133 : vector<1x128xf32>
    %cst_92 = arith.constant 0.000000e+00 : f32
    %135 = vector.broadcast %cst_92 : f32 to vector<1x128xf32>
    %136 = arith.maximumf %134, %135 : vector<1x128xf32>
    %cst_93 = arith.constant 0.000000e+00 : f32
    %137 = vector.broadcast %cst_93 : f32 to vector<1x128xf32>
    %138 = arith.minimumf %134, %137 : vector<1x128xf32>
    %cst_94 = arith.constant dense<0.000000e+00> : vector<1x128xf32>
    %139 = tpu.matmul %136, %125, %cst_94 {dimension_numbers = #tpu.dot_dimension_numbers<[1], [0], [0], [1], [0, 0, 1, 1], [], []>} : vector<1x128xf32>, vector<128x128xf32>, vector<1x128xf32> -> vector<1x128xf32>
    %cst_95 = arith.constant dense<0.000000e+00> : vector<1x128xf32>
    %140 = tpu.matmul %138, %127, %cst_95 {dimension_numbers = #tpu.dot_dimension_numbers<[1], [0], [0], [1], [0, 0, 1, 1], [], []>} : vector<1x128xf32>, vector<128x128xf32>, vector<1x128xf32> -> vector<1x128xf32>
    %141 = arith.addf %139, %140 : vector<1x128xf32>
    %142 = vector.extract_strided_slice %131 {offsets = [1, 0], sizes = [1, 128], strides = [1, 1]} : vector<8x128xf32> to vector<1x128xf32>
    %143 = arith.addf %141, %142 : vector<1x128xf32>
    %cst_96 = arith.constant 0.000000e+00 : f32
    %144 = vector.broadcast %cst_96 : f32 to vector<1x128xf32>
    %145 = arith.maximumf %143, %144 : vector<1x128xf32>
    %cst_97 = arith.constant dense<0.000000e+00> : vector<1x128xf32>
    %146 = tpu.matmul %145, %129, %cst_97 {dimension_numbers = #tpu.dot_dimension_numbers<[1], [0], [0], [1], [0, 0, 1, 1], [], []>} : vector<1x128xf32>, vector<128x128xf32>, vector<1x128xf32> -> vector<1x128xf32>
    %147 = vector.extract_strided_slice %131 {offsets = [2, 0], sizes = [1, 128], strides = [1, 1]} : vector<8x128xf32> to vector<1x128xf32>
    %148 = arith.addf %146, %147 : vector<1x128xf32>
    %149 = arith.negf %148 : vector<1x128xf32>
    %150 = math.exp %149 : vector<1x128xf32>
    %cst_98 = arith.constant 1.000000e+00 : f32
    %151 = vector.broadcast %cst_98 : f32 to vector<1x128xf32>
    %152 = arith.addf %151, %150 : vector<1x128xf32>
    %153 = arith.divf %151, %152 : vector<1x128xf32>
    %154 = arith.mulf %153, %138 : vector<1x128xf32>
    %155 = arith.addf %136, %154 : vector<1x128xf32>
    %156 = vector.extract_strided_slice %131 {offsets = [3, 0], sizes = [1, 128], strides = [1, 1]} : vector<8x128xf32> to vector<1x128xf32>
    %157 = arith.mulf %155, %156 : vector<1x128xf32>
    %158 = vector.extract_strided_slice %131 {offsets = [4, 0], sizes = [1, 128], strides = [1, 1]} : vector<8x128xf32> to vector<1x128xf32>
    %159 = arith.addf %157, %158 : vector<1x128xf32>
    %160 = vector.shape_cast %159 : vector<1x128xf32> to vector<1x1x128xf32>
    %c0_99 = arith.constant 0 : index
    %c3_100 = arith.constant 3 : index
    %c0_101 = arith.constant 0 : index
    %161 = vector.load %arg7[%c0_99, %c3_100, %c0_101] : memref<1x4x128xf32, #tpu.memory_space<vmem>>, vector<1x1x128xf32>
    tpu.vector_store %arg7[%c0_99, %c3_100, %c0_101], %160 {strides = array<i32>} : memref<1x4x128xf32, #tpu.memory_space<vmem>>, vector<1x1x128xf32>,
    return
  }
  func.func @transform_0(%arg0: i32) -> (i32, i32, i32) {
    %c0_i32 = arith.constant 0 : i32
    %c0_i32_0 = arith.constant 0 : i32
    %c0_i32_1 = arith.constant 0 : i32
    return %arg0, %c0_i32, %c0_i32_0 : i32, i32, i32
  }
  func.func @transform_1(%arg0: i32) -> (i32, i32, i32) {
    %c0_i32 = arith.constant 0 : i32
    %c0_i32_0 = arith.constant 0 : i32
    %c0_i32_1 = arith.constant 0 : i32
    %c0_i32_2 = arith.constant 0 : i32
    return %c0_i32, %c0_i32_0, %c0_i32_1 : i32, i32, i32
  }
  func.func @transform_2(%arg0: i32) -> (i32, i32, i32) {
    %c0_i32 = arith.constant 0 : i32
    %c0_i32_0 = arith.constant 0 : i32
    %c0_i32_1 = arith.constant 0 : i32
    %c0_i32_2 = arith.constant 0 : i32
    return %c0_i32, %c0_i32_0, %c0_i32_1 : i32, i32, i32
  }
  func.func @transform_3(%arg0: i32) -> (i32, i32, i32) {
    %c0_i32 = arith.constant 0 : i32
    %c0_i32_0 = arith.constant 0 : i32
    %c0_i32_1 = arith.constant 0 : i32
    %c0_i32_2 = arith.constant 0 : i32
    return %c0_i32, %c0_i32_0, %c0_i32_1 : i32, i32, i32
  }
  func.func @transform_4(%arg0: i32) -> (i32, i32, i32) {
    %c0_i32 = arith.constant 0 : i32
    %c0_i32_0 = arith.constant 0 : i32
    %c0_i32_1 = arith.constant 0 : i32
    %c0_i32_2 = arith.constant 0 : i32
    return %c0_i32, %c0_i32_0, %c0_i32_1 : i32, i32, i32
  }
  func.func @transform_5(%arg0: i32) -> (i32, i32, i32) {
    %c0_i32 = arith.constant 0 : i32
    %c0_i32_0 = arith.constant 0 : i32
    %c0_i32_1 = arith.constant 0 : i32
    %c0_i32_2 = arith.constant 0 : i32
    return %c0_i32, %c0_i32_0, %c0_i32_1 : i32, i32, i32
  }
  func.func @transform_6(%arg0: i32) -> (i32, i32, i32) {
    %c0_i32 = arith.constant 0 : i32
    %c0_i32_0 = arith.constant 0 : i32
    %c0_i32_1 = arith.constant 0 : i32
    return %arg0, %c0_i32, %c0_i32_0 : i32, i32, i32
  }
}

</mosaic_0001>

<llo_original>
// kernel: squeeze.4
$region0: #{squeeze.4}
  %s0 = inlined_call_operand.vmem [shape: f32[2,128], index: 0, kind: input, shape index: {}]
  %s1 = inlined_call_operand.vmem [shape: f32[2,32,4], index: 1, kind: output, shape index: {}]
  $region1: #{squeeze.4} parent=0
    #allocation0 [shape = 'u8[4096]{0}', space=vmem, size = 0x1000, scoped, tag = 'scoped mem for input reshape']
    %s3 = sshll.u32 1, 2
    %s4 = ssub.s32 %s3, 1
    %v5 = vld [vmem:[%s0] sm:%s4]
    %6 = vst [vmem:[#allocation0] sm:%s4] %v5
    %v7 = vld [vmem:[#allocation0] sm:$0x3]
    %vm8 = vcmask 31744
    %9 = vst.msk [vmem:[%s1] sm:$0x1] %vm8, %v7
    %s10 = scalar_lea.vmem %s1, 31
    %11 = vst.msk [vmem:[%s10] sm:$0x2] %vm8, %v7
    %v12 = vld [vmem:[#allocation0] sm:$0x3]
    %13 = vrot.lane.b32.xlu0 %v12, 124
    %v14 = vpop.permute.xlu0 %13
    %vm15 = vcmask 31744
    %s16 = scalar_lea.vmem %s1, 1
    %17 = vst.msk [vmem:[%s16] sm:$0x1] %vm15, %v14
    %s18 = scalar_lea.vmem %s1, 32
    %19 = vst.msk [vmem:[%s18] sm:$0x2] %vm15, %v14
    %v20 = vld [vmem:[#allocation0] sm:$0x3]
    %21 = vrot.lane.b32.xlu0 %v20, 120
    %v22 = vpop.permute.xlu0 %21
    %vm23 = vcmask 31744
    %s24 = scalar_lea.vmem %s1, 2
    %25 = vst.msk [vmem:[%s24] sm:$0x1] %vm23, %v22
    %s26 = scalar_lea.vmem %s1, 33
    %27 = vst.msk [vmem:[%s26] sm:$0x2] %vm23, %v22
    %v28 = vld [vmem:[#allocation0] sm:$0x3]
    %29 = vrot.lane.b32.xlu0 %v28, 116
    %v30 = vpop.permute.xlu0 %29
    %vm31 = vcmask 31744
    %s32 = scalar_lea.vmem %s1, 3
    %33 = vst.msk [vmem:[%s32] sm:$0x1] %vm31, %v30
    %s34 = scalar_lea.vmem %s1, 34
    %35 = vst.msk [vmem:[%s34] sm:$0x2] %vm31, %v30
    %v36 = vld [vmem:[#allocation0] sm:$0x3]
    %37 = vrot.lane.b32.xlu0 %v36, 112
    %v38 = vpop.permute.xlu0 %37
    %vm39 = vcmask 31744
    %s40 = scalar_lea.vmem %s1, 4
    %41 = vst.msk [vmem:[%s40] sm:$0x1] %vm39, %v38
    %s42 = scalar_lea.vmem %s1, 35
    %43 = vst.msk [vmem:[%s42] sm:$0x2] %vm39, %v38
    %v44 = vld [vmem:[#allocation0] sm:$0x3]
    %45 = vrot.lane.b32.xlu0 %v44, 108
    %v46 = vpop.permute.xlu0 %45
    %vm47 = vcmask 31744
    %s48 = scalar_lea.vmem %s1, 5
    %49 = vst.msk [vmem:[%s48] sm:$0x1] %vm47, %v46
    %s50 = scalar_lea.vmem %s1, 36
    %51 = vst.msk [vmem:[%s50] sm:$0x2] %vm47, %v46
    %v52 = vld [vmem:[#allocation0] sm:$0x3]
    %53 = vrot.lane.b32.xlu0 %v52, 104
    %v54 = vpop.permute.xlu0 %53
    %vm55 = vcmask 31744
    %s56 = scalar_lea.vmem %s1, 6
    %57 = vst.msk [vmem:[%s56] sm:$0x1] %vm55, %v54
    %s58 = scalar_lea.vmem %s1, 37
    %59 = vst.msk [vmem:[%s58] sm:$0x2] %vm55, %v54
    %v60 = vld [vmem:[#allocation0] sm:$0x3]
    %61 = vrot.lane.b32.xlu0 %v60, 100
    %v62 = vpop.permute.xlu0 %61
    %vm63 = vcmask 31744
    %s64 = scalar_lea.vmem %s1, 7
    %65 = vst.msk [vmem:[%s64] sm:$0x1] %vm63, %v62
    %s66 = scalar_lea.vmem %s1, 38
    %67 = vst.msk [vmem:[%s66] sm:$0x2] %vm63, %v62
    %v68 = vld [vmem:[#allocation0] sm:$0x3]
    %69 = vrot.lane.b32.xlu0 %v68, 96
    %v70 = vpop.permute.xlu0 %69
    %vm71 = vcmask 31744
    %s72 = scalar_lea.vmem %s1, 8
    %73 = vst.msk [vmem:[%s72] sm:$0x1] %vm71, %v70
    %s74 = scalar_lea.vmem %s1, 39
    %75 = vst.msk [vmem:[%s74] sm:$0x2] %vm71, %v70
    %v76 = vld [vmem:[#allocation0] sm:$0x3]
    %77 = vrot.lane.b32.xlu0 %v76, 92
    %v78 = vpop.permute.xlu0 %77
    %vm79 = vcmask 31744
    %s80 = scalar_lea.vmem %s1, 9
    %81 = vst.msk [vmem:[%s80] sm:$0x1] %vm79, %v78
    %s82 = scalar_lea.vmem %s1, 40
    %83 = vst.msk [vmem:[%s82] sm:$0x2] %vm79, %v78
    %v84 = vld [vmem:[#allocation0] sm:$0x3]
    %85 = vrot.lane.b32.xlu0 %v84, 88
    %v86 = vpop.permute.xlu0 %85
    %vm87 = vcmask 31744
    %s88 = scalar_lea.vmem %s1, 10
    %89 = vst.msk [vmem:[%s88] sm:$0x1] %vm87, %v86
    %s90 = scalar_lea.vmem %s1, 41
    %91 = vst.msk [vmem:[%s90] sm:$0x2] %vm87, %v86
    %v92 = vld [vmem:[#allocation0] sm:$0x3]
    %93 = vrot.lane.b32.xlu0 %v92, 84
    %v94 = vpop.permute.xlu0 %93
    %vm95 = vcmask 31744
    %s96 = scalar_lea.vmem %s1, 11
    %97 = vst.msk [vmem:[%s96] sm:$0x1] %vm95, %v94
    %s98 = scalar_lea.vmem %s1, 42
    %99 = vst.msk [vmem:[%s98] sm:$0x2] %vm95, %v94
    %v100 = vld [vmem:[#allocation0] sm:$0x3]
    %101 = vrot.lane.b32.xlu0 %v100, 80
    %v102 = vpop.permute.xlu0 %101
    %vm103 = vcmask 31744
    %s104 = scalar_lea.vmem %s1, 12
    %105 = vst.msk [vmem:[%s104] sm:$0x1] %vm103, %v102
    %s106 = scalar_lea.vmem %s1, 43
    %107 = vst.msk [vmem:[%s106] sm:$0x2] %vm103, %v102
    %v108 = vld [vmem:[#allocation0] sm:$0x3]
    %109 = vrot.lane.b32.xlu0 %v108, 76
    %v110 = vpop.permute.xlu0 %109
    %vm111 = vcmask 31744
    %s112 = scalar_lea.vmem %s1, 13
    %113 = vst.msk [vmem:[%s112] sm:$0x1] %vm111, %v110
    %s114 = scalar_lea.vmem %s1, 44
    %115 = vst.msk [vmem:[%s114] sm:$0x2] %vm111, %v110
    %v116 = vld [vmem:[#allocation0] sm:$0x3]
    %117 = vrot.lane.b32.xlu0 %v116, 72
    %v118 = vpop.permute.xlu0 %117
    %vm119 = vcmask 31744
    %s120 = scalar_lea.vmem %s1, 14
    %121 = vst.msk [vmem:[%s120] sm:$0x1] %vm119, %v118
    %s122 = scalar_lea.vmem %s1, 45
    %123 = vst.msk [vmem:[%s122] sm:$0x2] %vm119, %v118
    %v124 = vld [vmem:[#allocation0] sm:$0x3]
    %125 = vrot.lane.b32.xlu0 %v124, 68
    %v126 = vpop.permute.xlu0 %125
    %vm127 = vcmask 31744
    %s128 = scalar_lea.vmem %s1, 15
    %129 = vst.msk [vmem:[%s128] sm:$0x1] %vm127, %v126
    %s130 = scalar_lea.vmem %s1, 46
    %131 = vst.msk [vmem:[%s130] sm:$0x2] %vm127, %v126
    %v132 = vld [vmem:[#allocation0] sm:$0x3]
    %133 = vrot.lane.b32.xlu0 %v132, 64
    %v134 = vpop.permute.xlu0 %133
    %vm135 = vcmask 31744
    %s136 = scalar_lea.vmem %s1, 16
    %137 = vst.msk [vmem:[%s136] sm:$0x1] %vm135, %v134
    %s138 = scalar_lea.vmem %s1, 47
    %139 = vst.msk [vmem:[%s138] sm:$0x2] %vm135, %v134
    %v140 = vld [vmem:[#allocation0] sm:$0x3]
    %141 = vrot.lane.b32.xlu0 %v140, 60
    %v142 = vpop.permute.xlu0 %141
    %vm143 = vcmask 31744
    %s144 = scalar_lea.vmem %s1, 17
    %145 = vst.msk [vmem:[%s144] sm:$0x1] %vm143, %v142
    %s146 = scalar_lea.vmem %s1, 48
    %147 = vst.msk [vmem:[%s146] sm:$0x2] %vm143, %v142
    %v148 = vld [vmem:[#allocation0] sm:$0x3]
    %149 = vrot.lane.b32.xlu0 %v148, 56
    %v150 = vpop.permute.xlu0 %149
    %vm151 = vcmask 31744
    %s152 = scalar_lea.vmem %s1, 18
    %153 = vst.msk [vmem:[%s152] sm:$0x1] %vm151, %v150
    %s154 = scalar_lea.vmem %s1, 49
    %155 = vst.msk [vmem:[%s154] sm:$0x2] %vm151, %v150
    %v156 = vld [vmem:[#allocation0] sm:$0x3]
    %157 = vrot.lane.b32.xlu0 %v156, 52
    %v158 = vpop.permute.xlu0 %157
    %vm159 = vcmask 31744
    %s160 = scalar_lea.vmem %s1, 19
    %161 = vst.msk [vmem:[%s160] sm:$0x1] %vm159, %v158
    %s162 = scalar_lea.vmem %s1, 50
    %163 = vst.msk [vmem:[%s162] sm:$0x2] %vm159, %v158
    %v164 = vld [vmem:[#allocation0] sm:$0x3]
    %165 = vrot.lane.b32.xlu0 %v164, 48
    %v166 = vpop.permute.xlu0 %165
    %vm167 = vcmask 31744
    %s168 = scalar_lea.vmem %s1, 20
    %169 = vst.msk [vmem:[%s168] sm:$0x1] %vm167, %v166
    %s170 = scalar_lea.vmem %s1, 51
    %171 = vst.msk [vmem:[%s170] sm:$0x2] %vm167, %v166
    %v172 = vld [vmem:[#allocation0] sm:$0x3]
    %173 = vrot.lane.b32.xlu0 %v172, 44
    %v174 = vpop.permute.xlu0 %173
    %vm175 = vcmask 31744
    %s176 = scalar_lea.vmem %s1, 21
    %177 = vst.msk [vmem:[%s176] sm:$0x1] %vm175, %v174
    %s178 = scalar_lea.vmem %s1, 52
    %179 = vst.msk [vmem:[%s178] sm:$0x2] %vm175, %v174
    %v180 = vld [vmem:[#allocation0] sm:$0x3]
    %181 = vrot.lane.b32.xlu0 %v180, 40
    %v182 = vpop.permute.xlu0 %181
    %vm183 = vcmask 31744
    %s184 = scalar_lea.vmem %s1, 22
    %185 = vst.msk [vmem:[%s184] sm:$0x1] %vm183, %v182
    %s186 = scalar_lea.vmem %s1, 53
    %187 = vst.msk [vmem:[%s186] sm:$0x2] %vm183, %v182
    %v188 = vld [vmem:[#allocation0] sm:$0x3]
    %189 = vrot.lane.b32.xlu0 %v188, 36
    %v190 = vpop.permute.xlu0 %189
    %vm191 = vcmask 31744
    %s192 = scalar_lea.vmem %s1, 23
    %193 = vst.msk [vmem:[%s192] sm:$0x1] %vm191, %v190
    %s194 = scalar_lea.vmem %s1, 54
    %195 = vst.msk [vmem:[%s194] sm:$0x2] %vm191, %v190
    %v196 = vld [vmem:[#allocation0] sm:$0x3]
    %197 = vrot.lane.b32.xlu0 %v196, 32
    %v198 = vpop.permute.xlu0 %197
    %vm199 = vcmask 31744
    %s200 = scalar_lea.vmem %s1, 24
    %201 = vst.msk [vmem:[%s200] sm:$0x1] %vm199, %v198
    %s202 = scalar_lea.vmem %s1, 55
    %203 = vst.msk [vmem:[%s202] sm:$0x2] %vm199, %v198
    %v204 = vld [vmem:[#allocation0] sm:$0x3]
    %205 = vrot.lane.b32.xlu0 %v204, 28
    %v206 = vpop.permute.xlu0 %205
    %vm207 = vcmask 31744
    %s208 = scalar_lea.vmem %s1, 25
    %209 = vst.msk [vmem:[%s208] sm:$0x1] %vm207, %v206
    %s210 = scalar_lea.vmem %s1, 56
    %211 = vst.msk [vmem:[%s210] sm:$0x2] %vm207, %v206
    %v212 = vld [vmem:[#allocation0] sm:$0x3]
    %213 = vrot.lane.b32.xlu0 %v212, 24
    %v214 = vpop.permute.xlu0 %213
    %vm215 = vcmask 31744
    %s216 = scalar_lea.vmem %s1, 26
    %217 = vst.msk [vmem:[%s216] sm:$0x1] %vm215, %v214
    %s218 = scalar_lea.vmem %s1, 57
    %219 = vst.msk [vmem:[%s218] sm:$0x2] %vm215, %v214
    %v220 = vld [vmem:[#allocation0] sm:$0x3]
    %221 = vrot.lane.b32.xlu0 %v220, 20
    %v222 = vpop.permute.xlu0 %221
    %vm223 = vcmask 31744
    %s224 = scalar_lea.vmem %s1, 27
    %225 = vst.msk [vmem:[%s224] sm:$0x1] %vm223, %v222
    %s226 = scalar_lea.vmem %s1, 58
    %227 = vst.msk [vmem:[%s226] sm:$0x2] %vm223, %v222
    %v228 = vld [vmem:[#allocation0] sm:$0x3]
    %229 = vrot.lane.b32.xlu0 %v228, 16
    %v230 = vpop.permute.xlu0 %229
    %vm231 = vcmask 31744
    %s232 = scalar_lea.vmem %s1, 28
    %233 = vst.msk [vmem:[%s232] sm:$0x1] %vm231, %v230
    %s234 = scalar_lea.vmem %s1, 59
    %235 = vst.msk [vmem:[%s234] sm:$0x2] %vm231, %v230
    %v236 = vld [vmem:[#allocation0] sm:$0x3]
    %237 = vrot.lane.b32.xlu0 %v236, 12
    %v238 = vpop.permute.xlu0 %237
    %vm239 = vcmask 31744
    %s240 = scalar_lea.vmem %s1, 29
    %241 = vst.msk [vmem:[%s240] sm:$0x1] %vm239, %v238
    %s242 = scalar_lea.vmem %s1, 60
    %243 = vst.msk [vmem:[%s242] sm:$0x2] %vm239, %v238
    %v244 = vld [vmem:[#allocation0] sm:$0x3]
    %245 = vrot.lane.b32.xlu0 %v244, 8
    %v246 = vpop.permute.xlu0 %245
    %vm247 = vcmask 31744
    %s248 = scalar_lea.vmem %s1, 30
    %249 = vst.msk [vmem:[%s248] sm:$0x1] %vm247, %v246
    %s250 = scalar_lea.vmem %s1, 61
    %251 = vst.msk [vmem:[%s250] sm:$0x2] %vm247, %v246
    %v252 = vld [vmem:[#allocation0] sm:$0x3]
    %253 = vrot.lane.b32.xlu0 %v252, 4
    %v254 = vpop.permute.xlu0 %253
    %vm255 = vcmask 31744
    %s256 = scalar_lea.vmem %s1, 31
    %257 = vst.msk [vmem:[%s256] sm:$0x1] %vm255, %v254
    %s258 = scalar_lea.vmem %s1, 62
    %259 = vst.msk [vmem:[%s258] sm:$0x2] %vm255, %v254

// kernel: squeeze.5
$region0: #{squeeze.5}
  %s0 = inlined_call_operand.vmem [shape: f32[2,128], index: 0, kind: input, shape index: {}]
  %s1 = inlined_call_operand.vmem [shape: f32[2,16,8], index: 1, kind: output, shape index: {}]
  $region1: #{squeeze.5} parent=0
    #allocation0 [shape = 'u8[4096]{0}', space=vmem, size = 0x1000, scoped, tag = 'scoped mem for input reshape']
    %s3 = sshll.u32 1, 2
    %s4 = ssub.s32 %s3, 1
    %v5 = vld [vmem:[%s0] sm:%s4]
    %6 = vst [vmem:[#allocation0] sm:%s4] %v5
    %v7 = vld [vmem:[#allocation0] sm:$0x3]
    %vm8 = vcmask 64512
    %9 = vst.msk [vmem:[%s1] ss:$16 sm:$0x3] %vm8, %v7
    %v10 = vld [vmem:[#allocation0] sm:$0x3]
    %11 = vrot.lane.b32.xlu0 %v10, 120
    %v12 = vpop.permute.xlu0 %11
    %vm13 = vcmask 64512
    %s14 = scalar_lea.vmem %s1, 1
    %15 = vst.msk [vmem:[%s14] ss:$16 sm:$0x3] %vm13, %v12
    %v16 = vld [vmem:[#allocation0] sm:$0x3]
    %17 = vrot.lane.b32.xlu0 %v16, 112
    %v18 = vpop.permute.xlu0 %17
    %vm19 = vcmask 64512
    %s20 = scalar_lea.vmem %s1, 2
    %21 = vst.msk [vmem:[%s20] ss:$16 sm:$0x3] %vm19, %v18
    %v22 = vld [vmem:[#allocation0] sm:$0x3]
    %23 = vrot.lane.b32.xlu0 %v22, 104
    %v24 = vpop.permute.xlu0 %23
    %vm25 = vcmask 64512
    %s26 = scalar_lea.vmem %s1, 3
    %27 = vst.msk [vmem:[%s26] ss:$16 sm:$0x3] %vm25, %v24
    %v28 = vld [vmem:[#allocation0] sm:$0x3]
    %29 = vrot.lane.b32.xlu0 %v28, 96
    %v30 = vpop.permute.xlu0 %29
    %vm31 = vcmask 64512
    %s32 = scalar_lea.vmem %s1, 4
    %33 = vst.msk [vmem:[%s32] ss:$16 sm:$0x3] %vm31, %v30
    %v34 = vld [vmem:[#allocation0] sm:$0x3]
    %35 = vrot.lane.b32.xlu0 %v34, 88
    %v36 = vpop.permute.xlu0 %35
    %vm37 = vcmask 64512
    %s38 = scalar_lea.vmem %s1, 5
    %39 = vst.msk [vmem:[%s38] ss:$16 sm:$0x3] %vm37, %v36
    %v40 = vld [vmem:[#allocation0] sm:$0x3]
    %41 = vrot.lane.b32.xlu0 %v40, 80
    %v42 = vpop.permute.xlu0 %41
    %vm43 = vcmask 64512
    %s44 = scalar_lea.vmem %s1, 6
    %45 = vst.msk [vmem:[%s44] ss:$16 sm:$0x3] %vm43, %v42
    %v46 = vld [vmem:[#allocation0] sm:$0x3]
    %47 = vrot.lane.b32.xlu0 %v46, 72
    %v48 = vpop.permute.xlu0 %47
    %vm49 = vcmask 64512
    %s50 = scalar_lea.vmem %s1, 7
    %51 = vst.msk [vmem:[%s50] ss:$16 sm:$0x3] %vm49, %v48
    %v52 = vld [vmem:[#allocation0] sm:$0x3]
    %53 = vrot.lane.b32.xlu0 %v52, 64
    %v54 = vpop.permute.xlu0 %53
    %vm55 = vcmask 64512
    %s56 = scalar_lea.vmem %s1, 8
    %57 = vst.msk [vmem:[%s56] ss:$16 sm:$0x3] %vm55, %v54
    %v58 = vld [vmem:[#allocation0] sm:$0x3]
    %59 = vrot.lane.b32.xlu0 %v58, 56
    %v60 = vpop.permute.xlu0 %59
    %vm61 = vcmask 64512
    %s62 = scalar_lea.vmem %s1, 9
    %63 = vst.msk [vmem:[%s62] ss:$16 sm:$0x3] %vm61, %v60
    %v64 = vld [vmem:[#allocation0] sm:$0x3]
    %65 = vrot.lane.b32.xlu0 %v64, 48
    %v66 = vpop.permute.xlu0 %65
    %vm67 = vcmask 64512
    %s68 = scalar_lea.vmem %s1, 10
    %69 = vst.msk [vmem:[%s68] ss:$16 sm:$0x3] %vm67, %v66
    %v70 = vld [vmem:[#allocation0] sm:$0x3]
    %71 = vrot.lane.b32.xlu0 %v70, 40
    %v72 = vpop.permute.xlu0 %71
    %vm73 = vcmask 64512
    %s74 = scalar_lea.vmem %s1, 11
    %75 = vst.msk [vmem:[%s74] ss:$16 sm:$0x3] %vm73, %v72
    %v76 = vld [vmem:[#allocation0] sm:$0x3]
    %77 = vrot.lane.b32.xlu0 %v76, 32
    %v78 = vpop.permute.xlu0 %77
    %vm79 = vcmask 64512
    %s80 = scalar_lea.vmem %s1, 12
    %81 = vst.msk [vmem:[%s80] ss:$16 sm:$0x3] %vm79, %v78
    %v82 = vld [vmem:[#allocation0] sm:$0x3]
    %83 = vrot.lane.b32.xlu0 %v82, 24
    %v84 = vpop.permute.xlu0 %83
    %vm85 = vcmask 64512
    %s86 = scalar_lea.vmem %s1, 13
    %87 = vst.msk [vmem:[%s86] ss:$16 sm:$0x3] %vm85, %v84
    %v88 = vld [vmem:[#allocation0] sm:$0x3]
    %89 = vrot.lane.b32.xlu0 %v88, 16
    %v90 = vpop.permute.xlu0 %89
    %vm91 = vcmask 64512
    %s92 = scalar_lea.vmem %s1, 14
    %93 = vst.msk [vmem:[%s92] ss:$16 sm:$0x3] %vm91, %v90
    %v94 = vld [vmem:[#allocation0] sm:$0x3]
    %95 = vrot.lane.b32.xlu0 %v94, 8
    %v96 = vpop.permute.xlu0 %95
    %vm97 = vcmask 64512
    %s98 = scalar_lea.vmem %s1, 15
    %99 = vst.msk [vmem:[%s98] ss:$16 sm:$0x3] %vm97, %v96

// kernel: squeeze.6
$region0: #{squeeze.6}
  %s0 = inlined_call_operand.vmem [shape: f32[2,128], index: 0, kind: input, shape index: {}]
  %s1 = inlined_call_operand.hbm [shape: f32[2,8,16], index: 1, kind: output, shape index: {}]
  $region1: #{squeeze.6} parent=0
    #allocation0 [shape = 'u8[8192]{0}', space=vmem, size = 0x2000, scoped, tag = 'operand span for operand 1']
    #allocation1 [shape = 's32[1]{0}', space=sflag, size = 0x4, scoped, tag = 'scoped memory for squeeze.6']
    #allocation2 [shape = 'u8[4096]{0}', space=vmem, size = 0x1000, scoped, tag = 'scoped mem for input reshape']
    %2 = vsyncpa [#allocation1], 0
    %s4 = sshll.u32 1, 2
    %s5 = ssub.s32 %s4, 1
    %v6 = vld [vmem:[%s0] sm:%s5]
    %7 = vst [vmem:[#allocation2] sm:%s5] %v6
    %v8 = vld [vmem:[#allocation2] sm:$0x3]
    %vm9 = vcmask 130048
    %10 = vst.msk [vmem:[#allocation0] ss:$8 sm:$0x3] %vm9, %v8
    %v11 = vld [vmem:[#allocation2] sm:$0x3]
    %12 = vrot.lane.b32.xlu0 %v11, 112
    %v13 = vpop.permute.xlu0 %12
    %vm14 = vcmask 130048
    %s15 = scalar_lea.vmem [#allocation0], 1
    %16 = vst.msk [vmem:[%s15] ss:$8 sm:$0x3] %vm14, %v13
    %v17 = vld [vmem:[#allocation2] sm:$0x3]
    %18 = vrot.lane.b32.xlu0 %v17, 96
    %v19 = vpop.permute.xlu0 %18
    %vm20 = vcmask 130048
    %s21 = scalar_lea.vmem [#allocation0], 2
    %22 = vst.msk [vmem:[%s21] ss:$8 sm:$0x3] %vm20, %v19
    %v23 = vld [vmem:[#allocation2] sm:$0x3]
    %24 = vrot.lane.b32.xlu0 %v23, 80
    %v25 = vpop.permute.xlu0 %24
    %vm26 = vcmask 130048
    %s27 = scalar_lea.vmem [#allocation0], 3
    %28 = vst.msk [vmem:[%s27] ss:$8 sm:$0x3] %vm26, %v25
    %v29 = vld [vmem:[#allocation2] sm:$0x3]
    %30 = vrot.lane.b32.xlu0 %v29, 64
    %v31 = vpop.permute.xlu0 %30
    %vm32 = vcmask 130048
    %s33 = scalar_lea.vmem [#allocation0], 4
    %34 = vst.msk [vmem:[%s33] ss:$8 sm:$0x3] %vm32, %v31
    %v35 = vld [vmem:[#allocation2] sm:$0x3]
    %36 = vrot.lane.b32.xlu0 %v35, 48
    %v37 = vpop.permute.xlu0 %36
    %vm38 = vcmask 130048
    %s39 = scalar_lea.vmem [#allocation0], 5
    %40 = vst.msk [vmem:[%s39] ss:$8 sm:$0x3] %vm38, %v37
    %v41 = vld [vmem:[#allocation2] sm:$0x3]
    %42 = vrot.lane.b32.xlu0 %v41, 32
    %v43 = vpop.permute.xlu0 %42
    %vm44 = vcmask 130048
    %s45 = scalar_lea.vmem [#allocation0], 6
    %46 = vst.msk [vmem:[%s45] ss:$8 sm:$0x3] %vm44, %v43
    %v47 = vld [vmem:[#allocation2] sm:$0x3]
    %48 = vrot.lane.b32.xlu0 %v47, 16
    %v49 = vpop.permute.xlu0 %48
    %vm50 = vcmask 130048
    %s51 = scalar_lea.vmem [#allocation0], 7
    %52 = vst.msk [vmem:[%s51] ss:$8 sm:$0x3] %vm50, %v49
    %s54 = ssub.s32 256, 256
    %55 = vsyncadd [#allocation1], %s54
    %s57 = sshll.u32 [#allocation0], 4
    %s58 = int_to_ptr.vmem [resolvable:$true] %s57
    %60 = dma.vmem_to_hbm [thread:$0]  %s58, 256, %s1, [#allocation1]
    %61 = dma.done [#allocation1], 256
    %62 = vsyncpa [#allocation1], 1

// kernel: squeeze.7
$region0: #{squeeze.7}
  %s0 = inlined_call_operand.vmem [shape: f32[2,128], index: 0, kind: input, shape index: {}]
  %s1 = inlined_call_operand.hbm [shape: f32[2,4,32], index: 1, kind: output, shape index: {}]
  $region1: #{squeeze.7} parent=0
    #allocation0 [shape = 'u8[4096]{0}', space=vmem, size = 0x1000, scoped, tag = 'operand span for operand 1']
    #allocation1 [shape = 's32[1]{0}', space=sflag, size = 0x4, scoped, tag = 'scoped memory for squeeze.7']
    #allocation2 [shape = 'u8[8192]{0}', space=vmem, size = 0x2000, scoped, tag = 'scoped mem for output reshape']
    #allocation3 [shape = 'u8[4096]{0}', space=vmem, size = 0x1000, scoped, tag = 'scoped mem for input reshape']
    %2 = vsyncpa [#allocation1], 0
    %s4 = sshll.u32 1, 2
    %s5 = ssub.s32 %s4, 1
    %v6 = vld [vmem:[%s0] sm:%s5]
    %7 = vst [vmem:[#allocation3] sm:%s5] %v6
    %v8 = vld [vmem:[#allocation3] sm:$0x3]
    %vm9 = vcmask 261120
    %10 = vst.msk [vmem:[#allocation2] ss:$8 sm:$0x3] %vm9, %v8
    %v11 = vld [vmem:[#allocation3] sm:$0x3]
    %12 = vrot.lane.b32.xlu0 %v11, 96
    %v13 = vpop.permute.xlu0 %12
    %vm14 = vcmask 261120
    %s15 = scalar_lea.vmem [#allocation2], 1
    %16 = vst.msk [vmem:[%s15] ss:$8 sm:$0x3] %vm14, %v13
    %v17 = vld [vmem:[#allocation3] sm:$0x3]
    %18 = vrot.lane.b32.xlu0 %v17, 64
    %v19 = vpop.permute.xlu0 %18
    %vm20 = vcmask 261120
    %s21 = scalar_lea.vmem [#allocation2], 2
    %22 = vst.msk [vmem:[%s21] ss:$8 sm:$0x3] %vm20, %v19
    %v23 = vld [vmem:[#allocation3] sm:$0x3]
    %24 = vrot.lane.b32.xlu0 %v23, 32
    %v25 = vpop.permute.xlu0 %24
    %vm26 = vcmask 261120
    %s27 = scalar_lea.vmem [#allocation2], 3
    %28 = vst.msk [vmem:[%s27] ss:$8 sm:$0x3] %vm26, %v25
    %s30 = sshll.u32 1, 4
    %s31 = ssub.s32 %s30, 1
    %v33 = vld [vmem:[#allocation2] sm:%s31]
    %s34 = sshll.u32 1, 4
    %s35 = ssub.s32 %s34, 1
    %36 = vst [vmem:[#allocation0] sm:%s35] %v33
    %s37 = scalar_lea.vmem [#allocation2], 8
    %v38 = vld [vmem:[%s37] sm:%s31]
    %s39 = sshll.u32 1, 4
    %s40 = ssub.s32 %s39, 1
    %s41 = scalar_lea.vmem [#allocation0], 4
    %42 = vst [vmem:[%s41] sm:%s40] %v38
    %s44 = ssub.s32 128, 128
    %45 = vsyncadd [#allocation1], %s44
    %s47 = sshll.u32 [#allocation0], 4
    %s48 = int_to_ptr.vmem [resolvable:$true] %s47
    %50 = dma.vmem_to_hbm [thread:$0]  %s48, 128, %s1, [#allocation1]
    %51 = dma.done [#allocation1], 128
    %52 = vsyncpa [#allocation1], 1

// kernel: denoise_enc.1
$region0: #{denoise_enc.1}
  #allocation0 [shape = 'u32[]', space=smem, size = 0x4, offset = 0x4, fixed_abs, tag = 'smem constant byte address 0x4 - core index']
  #allocation1 [shape = 'u32[144,128]{1,0:T(1,128)}', space=vmem, size = 0x12000, scoped, tag = 'internal scratch']
  %s0 = inlined_call_operand.vmem [shape: f32[2,1,128], index: 0, kind: input, shape index: {}]
  %s1 = inlined_call_operand.hbm [shape: f32[4,128,128], index: 1, kind: input, shape index: {}]
  %s2 = inlined_call_operand.hbm [shape: f32[4,128,128], index: 2, kind: input, shape index: {}]
  %s3 = inlined_call_operand.hbm [shape: f32[4,128,128], index: 3, kind: input, shape index: {}]
  %s4 = inlined_call_operand.hbm [shape: f32[4,128,128], index: 4, kind: input, shape index: {}]
  %s5 = inlined_call_operand.hbm [shape: f32[4,8,128], index: 5, kind: input, shape index: {}]
  %s6 = inlined_call_operand.vmem [shape: f32[2,4,128], index: 6, kind: output, shape index: {}]
  %s7 = sld [smem:[#allocation0]]
  $region77: #{denoise_enc.1} parent=0
    _
  %s9 = ssub.s32 1, %s7
  %s10 = scalar_select 0, %s9, %s7
  $region1: #{denoise_enc.1} parent=0
    #allocation2 [shape = 'u8[262144]{0}', space=vmem, size = 0x40000, scoped, tag = 'input window, operand 1, single buffered']
    #allocation3 [shape = 's32[2]{0}', space=sflag, size = 0x8, scoped, tag = 'scoped memory for denoise_enc.1']
    #allocation4 [shape = 'u8[262144]{0}', space=vmem, size = 0x40000, scoped, tag = 'input window, operand 2, single buffered']
    #allocation5 [shape = 's32[1]{0}', space=sflag, size = 0x4, scoped, tag = 'scoped memory for denoise_enc.1']
    #allocation6 [shape = 'u8[262144]{0}', space=vmem, size = 0x40000, scoped, tag = 'input window, operand 3, single buffered']
    #allocation7 [shape = 'u8[262144]{0}', space=vmem, size = 0x40000, scoped, tag = 'input window, operand 4, single buffered']
    #allocation8 [shape = 's32[1]{0}', space=sflag, size = 0x4, scoped, tag = 'scoped memory for denoise_enc.1']
    #allocation9 [shape = 'u8[16384]{0}', space=vmem, size = 0x4000, scoped, tag = 'input window, operand 5, single buffered']
    %11 = vsyncpa [#allocation3], 0
    %12 = vsyncpa [#allocation5], 0
    %13 = vsyncpa [#allocation8], 0
    loop: start=0, step=1, limit=4
    $region2: #{denoise_enc.1} parent=1 // loop_pre_header
      _
    $region3: #{denoise_enc.1} parent=1 // loop_header
      %s15 = sphi 0, %s19
      %p16 = scmp.ge.s32.totalorder %s15, 4
      %s25 = sphi 0, %s27
      %s28 = sphi 0, %s25
      %s29 = sphi 0, %s28
      %s45 = sphi 0, %s29
      %s49 = sphi 0, %s49
      %s51 = sphi 0, %s49
      %s52 = sphi 0, %s51
      %s66 = sphi 0, %s52
      %s70 = sphi 0, %s70
      %s72 = sphi 0, %s70
      %s73 = sphi 0, %s72
      %s87 = sphi 0, %s73
      %s91 = sphi 0, %s91
      %s93 = sphi 0, %s91
      %s94 = sphi 0, %s93
      %s108 = sphi 0, %s94
      %s112 = sphi 0, %s112
      %s114 = sphi 0, %s112
      %s115 = sphi 0, %s114
      %s129 = sphi 0, %s115
      %s133 = sphi 0, %s133
      %s135 = sphi 0, %s133
      %s136 = sphi 0, %s135
      %s150 = sphi 0, %s136
      %s156 = sphi 0, %s158
      %s159 = sphi 0, %s156
      %s160 = sphi 0, %s159
      %s176 = sphi 0, %s160
    $region4: #{denoise_enc.1} parent=1 // loop_header_branch
      %18 = sbr.rel (%p16) target = $region8
    $region5: #{denoise_enc.1} parent=1 // loop_body
      %s20 = ssub.s32 %s15, 1
      %s21 = ssub.s32 %s15, 2
      %s22 = sadd.s32 %s15, 1
      %s23 = ssub.s32 %s15, %s22
      %p24 = scmp.eq.s32.totalorder %s23, 0
      %s26 = sadd.s32 %s25, 1
      %s27 = scalar_select %p24, %s25, %s26
      %p30 = pneg %p24
      %p31 = scmp.eq.s32.totalorder %s15, 1
      %p32 = por %p30, %p31
      %p33 = scmp.ne.s32.totalorder %s25, %s28
      %p34 = scmp.eq.s32.totalorder %s15, 0
      %p35 = por %p33, %p34
      %p36 = scmp.ne.s32.totalorder %s25, %s28
      %p37 = scmp.eq.s32.totalorder %s20, 1
      %p38 = por %p36, %p37
      %p39 = scmp.ne.s32.totalorder %s28, %s29
      %p40 = scmp.eq.s32.totalorder %s20, 0
      %p41 = por %p39, %p40
      %p42 = scmp.ne.s32.totalorder %s28, %s29
      %p43 = scmp.eq.s32.totalorder %s21, 1
      %p44 = por %p42, %p43
      %p46 = scmp.ne.s32.totalorder %s29, %s45
      %p47 = scmp.eq.s32.totalorder %s21, 0
      %p48 = por %p46, %p47
      %s50 = sadd.s32 %s49, 1
      %p53 = scmp.eq.s32.totalorder %s15, 1
      %p54 = scmp.ne.s32.totalorder %s49, %s51
      %p55 = scmp.eq.s32.totalorder %s15, 0
      %p56 = por %p54, %p55
      %p57 = scmp.ne.s32.totalorder %s49, %s51
      %p58 = scmp.eq.s32.totalorder %s20, 1
      %p59 = por %p57, %p58
      %p60 = scmp.ne.s32.totalorder %s51, %s52
      %p61 = scmp.eq.s32.totalorder %s20, 0
      %p62 = por %p60, %p61
      %p63 = scmp.ne.s32.totalorder %s51, %s52
      %p64 = scmp.eq.s32.totalorder %s21, 1
      %p65 = por %p63, %p64
      %p67 = scmp.ne.s32.totalorder %s52, %s66
      %p68 = scmp.eq.s32.totalorder %s21, 0
      %p69 = por %p67, %p68
      %s71 = sadd.s32 %s70, 1
      %p74 = scmp.eq.s32.totalorder %s15, 1
      %p75 = scmp.ne.s32.totalorder %s70, %s72
      %p76 = scmp.eq.s32.totalorder %s15, 0
      %p77 = por %p75, %p76
      %p78 = scmp.ne.s32.totalorder %s70, %s72
      %p79 = scmp.eq.s32.totalorder %s20, 1
      %p80 = por %p78, %p79
      %p81 = scmp.ne.s32.totalorder %s72, %s73
      %p82 = scmp.eq.s32.totalorder %s20, 0
      %p83 = por %p81, %p82
      %p84 = scmp.ne.s32.totalorder %s72, %s73
      %p85 = scmp.eq.s32.totalorder %s21, 1
      %p86 = por %p84, %p85
      %p88 = scmp.ne.s32.totalorder %s73, %s87
      %p89 = scmp.eq.s32.totalorder %s21, 0
      %p90 = por %p88, %p89
      %s92 = sadd.s32 %s91, 1
      %p95 = scmp.eq.s32.totalorder %s15, 1
      %p96 = scmp.ne.s32.totalorder %s91, %s93
      %p97 = scmp.eq.s32.totalorder %s15, 0
      %p98 = por %p96, %p97
      %p99 = scmp.ne.s32.totalorder %s91, %s93
      %p100 = scmp.eq.s32.totalorder %s20, 1
      %p101 = por %p99, %p100
      %p102 = scmp.ne.s32.totalorder %s93, %s94
      %p103 = scmp.eq.s32.totalorder %s20, 0
      %p104 = por %p102, %p103
      %p105 = scmp.ne.s32.totalorder %s93, %s94
      %p106 = scmp.eq.s32.totalorder %s21, 1
      %p107 = por %p105, %p106
      %p109 = scmp.ne.s32.totalorder %s94, %s108
      %p110 = scmp.eq.s32.totalorder %s21, 0
      %p111 = por %p109, %p110
      %s113 = sadd.s32 %s112, 1
      %p116 = scmp.eq.s32.totalorder %s15, 1
      %p117 = scmp.ne.s32.totalorder %s112, %s114
      %p118 = scmp.eq.s32.totalorder %s15, 0
      %p119 = por %p117, %p118
      %p120 = scmp.ne.s32.totalorder %s112, %s114
      %p121 = scmp.eq.s32.totalorder %s20, 1
      %p122 = por %p120, %p121
      %p123 = scmp.ne.s32.totalorder %s114, %s115
      %p124 = scmp.eq.s32.totalorder %s20, 0
      %p125 = por %p123, %p124
      %p126 = scmp.ne.s32.totalorder %s114, %s115
      %p127 = scmp.eq.s32.totalorder %s21, 1
      %p128 = por %p126, %p127
      %p130 = scmp.ne.s32.totalorder %s115, %s129
      %p131 = scmp.eq.s32.totalorder %s21, 0
      %p132 = por %p130, %p131
      %s134 = sadd.s32 %s133, 1
      %p137 = scmp.eq.s32.totalorder %s15, 1
      %p138 = scmp.ne.s32.totalorder %s133, %s135
      %p139 = scmp.eq.s32.totalorder %s15, 0
      %p140 = por %p138, %p139
      %p141 = scmp.ne.s32.totalorder %s133, %s135
      %p142 = scmp.eq.s32.totalorder %s20, 1
      %p143 = por %p141, %p142
      %p144 = scmp.ne.s32.totalorder %s135, %s136
      %p145 = scmp.eq.s32.totalorder %s20, 0
      %p146 = por %p144, %p145
      %p147 = scmp.ne.s32.totalorder %s135, %s136
      %p148 = scmp.eq.s32.totalorder %s21, 1
      %p149 = por %p147, %p148
      %p151 = scmp.ne.s32.totalorder %s136, %s150
      %p152 = scmp.eq.s32.totalorder %s21, 0
      %p153 = por %p151, %p152
      %s154 = ssub.s32 %s15, %s22
      %p155 = scmp.eq.s32.totalorder %s154, 0
      %s157 = sadd.s32 %s156, 1
      %s158 = scalar_select %p155, %s156, %s157
      %p161 = pneg %p155
      %p162 = scmp.eq.s32.totalorder %s15, 1
      %p163 = por %p161, %p162
      %p164 = scmp.ne.s32.totalorder %s156, %s159
      %p165 = scmp.eq.s32.totalorder %s15, 0
      %p166 = por %p164, %p165
      %p167 = scmp.ne.s32.totalorder %s156, %s159
      %p168 = scmp.eq.s32.totalorder %s20, 1
      %p169 = por %p167, %p168
      %p170 = scmp.ne.s32.totalorder %s159, %s160
      %p171 = scmp.eq.s32.totalorder %s20, 0
      %p172 = por %p170, %p171
      %p173 = scmp.ne.s32.totalorder %s159, %s160
      %p174 = scmp.eq.s32.totalorder %s21, 1
      %p175 = por %p173, %p174
      %p177 = scmp.ne.s32.totalorder %s160, %s176
      %p178 = scmp.eq.s32.totalorder %s21, 0
      %p179 = por %p177, %p178
      %p180 = scmp.le.s32.totalorder 1, %s15
      %p181 = scmp.lt.s32.totalorder %s15, 3
      %p182 = pnand %p180, %p181
      %p183 = pneg %p182
      // Predicated region
      $region9: #{denoise_enc.1} parent=5 // pred_check
        _
      $region10: #{denoise_enc.1} parent=5 // pred_check_branch
        %185 = sbr.rel (%p182) target = $region12
      $region11: #{denoise_enc.1} parent=5 // pred_region
        %s186 = ssub.s32 %s15, 1
        // Predicated region
        $region13: #{denoise_enc.1} parent=11 // pred_check
          %p187 = pneg %p62
        $region14: #{denoise_enc.1} parent=11 // pred_check_branch
          %189 = sbr.rel (%p187) target = $region16
        $region15: #{denoise_enc.1} parent=11 // pred_region
          %s191 = ssub.s32 8192, 8192
          %192 = vsyncadd [#allocation3], %s191
          %s193 = sshll.u32 [#allocation2], 4
          %s194 = int_to_ptr.vmem [resolvable:$true] %s193
          %199 = dma.hbm_to_vmem [thread:$0]  %s1, 8192, %s194, [#allocation3], 128, 128, 8
        $region16: #{denoise_enc.1} parent=11 // pred_fallthru
          _
        // Predicated region
        $region17: #{denoise_enc.1} parent=11 // pred_check
          %p200 = pneg %p83
        $region18: #{denoise_enc.1} parent=11 // pred_check_branch
          %202 = sbr.rel (%p200) target = $region20
        $region19: #{denoise_enc.1} parent=11 // pred_region
          %s204 = ssub.s32 8192, 8192
          %205 = vsyncadd [#allocation5], %s204
          %s206 = sshll.u32 [#allocation4], 4
          %s207 = int_to_ptr.vmem [resolvable:$true] %s206
          %212 = dma.hbm_to_vmem [thread:$0]  %s2, 8192, %s207, [#allocation5], 128, 128, 8
        $region20: #{denoise_enc.1} parent=11 // pred_fallthru
          _
        // Predicated region
        $region21: #{denoise_enc.1} parent=11 // pred_check
          %p213 = pneg %p104
        $region22: #{denoise_enc.1} parent=11 // pred_check_branch
          %215 = sbr.rel (%p213) target = $region24
        $region23: #{denoise_enc.1} parent=11 // pred_region
          %s217 = ssub.s32 8192, 8192
          %218 = vsyncadd [#allocation5], %s217
          %s219 = sshll.u32 [#allocation6], 4
          %s220 = int_to_ptr.vmem [resolvable:$true] %s219
          %225 = dma.hbm_to_vmem [thread:$0]  %s3, 8192, %s220, [#allocation5], 128, 128, 8
        $region24: #{denoise_enc.1} parent=11 // pred_fallthru
          _
        // Predicated region
        $region25: #{denoise_enc.1} parent=11 // pred_check
          %p226 = pneg %p125
        $region26: #{denoise_enc.1} parent=11 // pred_check_branch
          %228 = sbr.rel (%p226) target = $region28
        $region27: #{denoise_enc.1} parent=11 // pred_region
          %s230 = ssub.s32 8192, 8192
          %231 = vsyncadd [#allocation8], %s230
          %s232 = sshll.u32 [#allocation7], 4
          %s233 = int_to_ptr.vmem [resolvable:$true] %s232
          %238 = dma.hbm_to_vmem [thread:$0]  %s4, 8192, %s233, [#allocation8], 128, 128, 8
        $region28: #{denoise_enc.1} parent=11 // pred_fallthru
          _
        // Predicated region
        $region29: #{denoise_enc.1} parent=11 // pred_check
          %p239 = pneg %p146
        $region30: #{denoise_enc.1} parent=11 // pred_check_branch
          %241 = sbr.rel (%p239) target = $region32
        $region31: #{denoise_enc.1} parent=11 // pred_region
          %s243 = ssub.s32 512, 512
          %244 = vsyncadd [#allocation8], %s243
          %s245 = sshll.u32 [#allocation9], 4
          %s246 = int_to_ptr.vmem [resolvable:$true] %s245
          %251 = dma.hbm_to_vmem [thread:$0]  %s5, 512, %s246, [#allocation8], 128, 128, 8
        $region32: #{denoise_enc.1} parent=11 // pred_fallthru
          _
      $region12: #{denoise_enc.1} parent=5 // pred_fallthru
        _
      %p252 = scmp.lt.s32.totalorder %s15, 2
      // Predicated region
      $region33: #{denoise_enc.1} parent=5 // pred_check
        %p253 = pneg %p252
      $region34: #{denoise_enc.1} parent=5 // pred_check_branch
        %255 = sbr.rel (%p253) target = $region36
      $region35: #{denoise_enc.1} parent=5 // pred_region
        // Predicated region
        $region37: #{denoise_enc.1} parent=35 // pred_check
          %p256 = pneg %p35
        $region38: #{denoise_enc.1} parent=35 // pred_check_branch
          %258 = sbr.rel (%p256) target = $region40
        $region39: #{denoise_enc.1} parent=35 // pred_region
          %p259 = scmp.lt.s32.totalorder %s15, 1
          %s260 = scalar_select %p259, %s15, 1
          %s261 = scalar_lea.vmem %s0, %s260
        $region40: #{denoise_enc.1} parent=35 // pred_fallthru
          _
      $region36: #{denoise_enc.1} parent=5 // pred_fallthru
        _
      %p262 = scmp.le.s32.totalorder 1, %s15
      %p263 = scmp.lt.s32.totalorder %s15, 3
      %p264 = pnand %p262, %p263
      %p265 = pneg %p264
      // Predicated region
      $region41: #{denoise_enc.1} parent=5 // pred_check
        _
      $region42: #{denoise_enc.1} parent=5 // pred_check_branch
        %267 = sbr.rel (%p264) target = $region44
      $region43: #{denoise_enc.1} parent=5 // pred_region
        %s268 = ssub.s32 %s15, 1
        // Predicated region
        $region45: #{denoise_enc.1} parent=43 // pred_check
          %p269 = pneg %p62
        $region46: #{denoise_enc.1} parent=43 // pred_check_branch
          %271 = sbr.rel (%p269) target = $region48
        $region47: #{denoise_enc.1} parent=43 // pred_region
          %272 = dma.done [#allocation3], 8192
        $region48: #{denoise_enc.1} parent=43 // pred_fallthru
          _
        // Predicated region
        $region49: #{denoise_enc.1} parent=43 // pred_check
          %p273 = pneg %p83
        $region50: #{denoise_enc.1} parent=43 // pred_check_branch
          %275 = sbr.rel (%p273) target = $region52
        $region51: #{denoise_enc.1} parent=43 // pred_region
          %276 = dma.done [#allocation5], 8192
        $region52: #{denoise_enc.1} parent=43 // pred_fallthru
          _
        // Predicated region
        $region53: #{denoise_enc.1} parent=43 // pred_check
          %p277 = pneg %p104
        $region54: #{denoise_enc.1} parent=43 // pred_check_branch
          %279 = sbr.rel (%p277) target = $region56
        $region55: #{denoise_enc.1} parent=43 // pred_region
          %280 = dma.done [#allocation5], 8192
        $region56: #{denoise_enc.1} parent=43 // pred_fallthru
          _
        // Predicated region
        $region57: #{denoise_enc.1} parent=43 // pred_check
          %p281 = pneg %p125
        $region58: #{denoise_enc.1} parent=43 // pred_check_branch
          %283 = sbr.rel (%p281) target = $region60
        $region59: #{denoise_enc.1} parent=43 // pred_region
          %284 = dma.done [#allocation8], 8192
        $region60: #{denoise_enc.1} parent=43 // pred_fallthru
          _
        // Predicated region
        $region61: #{denoise_enc.1} parent=43 // pred_check
          %p285 = pneg %p146
        $region62: #{denoise_enc.1} parent=43 // pred_check_branch
          %287 = sbr.rel (%p285) target = $region64
        $region63: #{denoise_enc.1} parent=43 // pred_region
          %288 = dma.done [#allocation8], 512
        $region64: #{denoise_enc.1} parent=43 // pred_fallthru
          _
        %p289 = scmp.lt.s32.totalorder %s20, 1
        %s290 = scalar_select %p289, %s20, 1
        %s291 = scalar_lea.vmem %s0, %s290
        %p292 = pneg %p41
        %p293 = pneg %p38
        %p294 = pneg %p62
        %p295 = pneg %p59
        %p296 = pneg %p83
        %p297 = pneg %p80
        %p298 = pneg %p104
        %p299 = pneg %p101
        %p300 = pneg %p125
        %p301 = pneg %p122
        %p302 = pneg %p146
        %p303 = pneg %p143
        %p304 = pneg %p172
        %p305 = pneg %p169
        %p306 = scmp.lt.s32.totalorder %s20, 1
        %s307 = scalar_select %p306, %s20, 1
        %s308 = smul.addr %s307, 4
        %s309 = scalar_lea.vmem %s6, %s308
        %p310 = scmp.lt.s32.totalorder %s20, 1
        %s311 = scalar_select %p310, %s20, 1
        %s312 = scalar_lea.vmem %s0, %s311
        %p313 = scmp.lt.s32.totalorder %s20, 1
        %s314 = scalar_select %p313, %s20, 1
        %s315 = smul.addr %s314, 4
        %s316 = scalar_lea.vmem %s6, %s315
        %v317 = vld [vmem:[%s312] sm:$0x1]
        %v318 = vld [vmem:[#allocation2] sm:$0xff]
        %v319 = vld [vmem:[#allocation2 + $0x8] sm:$0xff]
        %v320 = vld [vmem:[#allocation2 + $0x10] sm:$0xff]
        %v321 = vld [vmem:[#allocation2 + $0x18] sm:$0xff]
        %v322 = vld [vmem:[#allocation2 + $0x20] sm:$0xff]
        %v323 = vld [vmem:[#allocation2 + $0x28] sm:$0xff]
        %v324 = vld [vmem:[#allocation2 + $0x30] sm:$0xff]
        %v325 = vld [vmem:[#allocation2 + $0x38] sm:$0xff]
        %v326 = vld [vmem:[#allocation2 + $0x40] sm:$0xff]
        %v327 = vld [vmem:[#allocation2 + $0x48] sm:$0xff]
        %v328 = vld [vmem:[#allocation2 + $0x50] sm:$0xff]
        %v329 = vld [vmem:[#allocation2 + $0x58] sm:$0xff]
        %v330 = vld [vmem:[#allocation2 + $0x60] sm:$0xff]
        %v331 = vld [vmem:[#allocation2 + $0x68] sm:$0xff]
        %v332 = vld [vmem:[#allocation2 + $0x70] sm:$0xff]
        %v333 = vld [vmem:[#allocation2 + $0x78] sm:$0xff]
        %v334 = vld [vmem:[#allocation4] sm:$0xff]
        %v335 = vld [vmem:[#allocation4 + $0x8] sm:$0xff]
        %v336 = vld [vmem:[#allocation4 + $0x10] sm:$0xff]
        %v337 = vld [vmem:[#allocation4 + $0x18] sm:$0xff]
        %v338 = vld [vmem:[#allocation4 + $0x20] sm:$0xff]
        %v339 = vld [vmem:[#allocation4 + $0x28] sm:$0xff]
        %v340 = vld [vmem:[#allocation4 + $0x30] sm:$0xff]
        %v341 = vld [vmem:[#allocation4 + $0x38] sm:$0xff]
        %v342 = vld [vmem:[#allocation4 + $0x40] sm:$0xff]
        %v343 = vld [vmem:[#allocation4 + $0x48] sm:$0xff]
        %v344 = vld [vmem:[#allocation4 + $0x50] sm:$0xff]
        %v345 = vld [vmem:[#allocation4 + $0x58] sm:$0xff]
        %v346 = vld [vmem:[#allocation4 + $0x60] sm:$0xff]
        %v347 = vld [vmem:[#allocation4 + $0x68] sm:$0xff]
        %v348 = vld [vmem:[#allocation4 + $0x70] sm:$0xff]
        %v349 = vld [vmem:[#allocation4 + $0x78] sm:$0xff]
        %v350 = vld [vmem:[#allocation6] sm:$0xff]
        %v351 = vld [vmem:[#allocation6 + $0x8] sm:$0xff]
        %v352 = vld [vmem:[#allocation6 + $0x10] sm:$0xff]
        %v353 = vld [vmem:[#allocation6 + $0x18] sm:$0xff]
        %v354 = vld [vmem:[#allocation6 + $0x20] sm:$0xff]
        %v355 = vld [vmem:[#allocation6 + $0x28] sm:$0xff]
        %v356 = vld [vmem:[#allocation6 + $0x30] sm:$0xff]
        %v357 = vld [vmem:[#allocation6 + $0x38] sm:$0xff]
        %v358 = vld [vmem:[#allocation6 + $0x40] sm:$0xff]
        %v359 = vld [vmem:[#allocation6 + $0x48] sm:$0xff]
        %v360 = vld [vmem:[#allocation6 + $0x50] sm:$0xff]
        %v361 = vld [vmem:[#allocation6 + $0x58] sm:$0xff]
        %v362 = vld [vmem:[#allocation6 + $0x60] sm:$0xff]
        %v363 = vld [vmem:[#allocation6 + $0x68] sm:$0xff]
        %v364 = vld [vmem:[#allocation6 + $0x70] sm:$0xff]
        %v365 = vld [vmem:[#allocation6 + $0x78] sm:$0xff]
        %v366 = vld [vmem:[#allocation7] sm:$0xff]
        %v367 = vld [vmem:[#allocation7 + $0x8] sm:$0xff]
        %v368 = vld [vmem:[#allocation7 + $0x10] sm:$0xff]
        %v369 = vld [vmem:[#allocation7 + $0x18] sm:$0xff]
        %v370 = vld [vmem:[#allocation7 + $0x20] sm:$0xff]
        %v371 = vld [vmem:[#allocation7 + $0x28] sm:$0xff]
        %v372 = vld [vmem:[#allocation7 + $0x30] sm:$0xff]
        %v373 = vld [vmem:[#allocation7 + $0x38] sm:$0xff]
        %v374 = vld [vmem:[#allocation7 + $0x40] sm:$0xff]
        %v375 = vld [vmem:[#allocation7 + $0x48] sm:$0xff]
        %v376 = vld [vmem:[#allocation7 + $0x50] sm:$0xff]
        %v377 = vld [vmem:[#allocation7 + $0x58] sm:$0xff]
        %v378 = vld [vmem:[#allocation7 + $0x60] sm:$0xff]
        %v379 = vld [vmem:[#allocation7 + $0x68] sm:$0xff]
        %v380 = vld [vmem:[#allocation7 + $0x70] sm:$0xff]
        %v381 = vld [vmem:[#allocation7 + $0x78] sm:$0xff]
        %v382 = vld [vmem:[#allocation9] sm:$0xff]
        %383 = vmatprep.subr.mxu0 0.0
        %384 = vmatpush1.msra.mxu0 %v333
        %385 = vmatprep.subr.mxu0 0.0
        %386 = vmatpush1.msra.mxu0 %v332
        %387 = vmatprep.subr.mxu0 0.0
        %388 = vmatpush1.msra.mxu0 %v331
        %389 = vmatprep.subr.mxu0 0.0
        %390 = vmatpush1.msra.mxu0 %v330
        %391 = vmatprep.subr.mxu0 0.0
        %392 = vmatpush1.msra.mxu0 %v329
        %393 = vmatprep.subr.mxu0 0.0
        %394 = vmatpush1.msra.mxu0 %v328
        %395 = vmatprep.subr.mxu0 0.0
        %396 = vmatpush1.msra.mxu0 %v327
        %397 = vmatprep.subr.mxu0 0.0
        %398 = vmatpush1.msra.mxu0 %v326
        %399 = vmatprep.subr.mxu0 0.0
        %400 = vmatpush1.msra.mxu0 %v325
        %401 = vmatprep.subr.mxu0 0.0
        %402 = vmatpush1.msra.mxu0 %v324
        %403 = vmatprep.subr.mxu0 0.0
        %404 = vmatpush1.msra.mxu0 %v323
        %405 = vmatprep.subr.mxu0 0.0
        %406 = vmatpush1.msra.mxu0 %v322
        %407 = vmatprep.subr.mxu0 0.0
        %408 = vmatpush1.msra.mxu0 %v321
        %409 = vmatprep.subr.mxu0 0.0
        %410 = vmatpush1.msra.mxu0 %v320
        %411 = vmatprep.subr.mxu0 0.0
        %412 = vmatpush1.msra.mxu0 %v319
        %413 = vmatprep.subr.mxu0 0.0
        %414 = vmatpush1.msra.mxu0 %v318
        %415 = vmatprep.subr.mxu0 0.0
        %416 = vmatpush2.msra.mxu0 0.0
        %417 = vmatprep.subr.mxu0 0.0
        %418 = vmatpush2.msra.mxu0 0.0
        %419 = vmatprep.subr.mxu0 0.0
        %420 = vmatpush2.msra.mxu0 0.0
        %421 = vmatprep.subr.mxu0 0.0
        %422 = vmatpush2.msra.mxu0 0.0
        %423 = vmatprep.subr.mxu0 0.0
        %424 = vmatpush2.msra.mxu0 0.0
        %425 = vmatprep.subr.mxu0 0.0
        %426 = vmatpush2.msra.mxu0 0.0
        %427 = vmatprep.subr.mxu0 0.0
        %428 = vmatpush2.msra.mxu0 0.0
        %429 = vmatprep.subr.mxu0 0.0
        %430 = vmatpush2.msra.mxu0 0.0
        %431 = vmatprep.subr.mxu0 0.0
        %432 = vmatpush2.msra.mxu0 0.0
        %433 = vmatprep.subr.mxu0 0.0
        %434 = vmatpush2.msra.mxu0 0.0
        %435 = vmatprep.subr.mxu0 0.0
        %436 = vmatpush2.msra.mxu0 0.0
        %437 = vmatprep.subr.mxu0 0.0
        %438 = vmatpush2.msra.mxu0 0.0
        %439 = vmatprep.subr.mxu0 0.0
        %440 = vmatpush2.msra.mxu0 0.0
        %441 = vmatprep.subr.mxu0 0.0
        %442 = vmatpush2.msra.mxu0 0.0
        %443 = vmatprep.subr.mxu0 0.0
        %444 = vmatpush2.msra.mxu0 0.0
        %445 = vmatprep.subr.mxu0 0.0
        %446 = vmatpush2.msra.mxu0 0.0
        %447 = vmatprep.mubr.f32.mxu0 0.0
        %448 = vmatmul.mubr.f32.gmra.mxu0 %v317
        %v449 = vpop.f32.mrf.mxu0
        %v450 = vadd.f32 %v382, %v449
        %v451 = vpop.f32.mrf.mxu0
        %452 = vdwg.mxu0
        %v453 = vmax.f32 %v450, 0.0
        %v454 = vmin.f32 %v450, 0.0
        %455 = vmatprep.subr.mxu0 0.0
        %456 = vmatpush1.msra.mxu0 %v365
        %457 = vmatprep.subr.mxu0 0.0
        %458 = vmatpush1.msra.mxu0 %v364
        %459 = vmatprep.subr.mxu0 0.0
        %460 = vmatpush1.msra.mxu0 %v363
        %461 = vmatprep.subr.mxu0 0.0
        %462 = vmatpush1.msra.mxu0 %v362
        %463 = vmatprep.subr.mxu0 0.0
        %464 = vmatpush1.msra.mxu0 %v361
        %465 = vmatprep.subr.mxu0 0.0
        %466 = vmatpush1.msra.mxu0 %v360
        %467 = vmatprep.subr.mxu0 0.0
        %468 = vmatpush1.msra.mxu0 %v359
        %469 = vmatprep.subr.mxu0 0.0
        %470 = vmatpush1.msra.mxu0 %v358
        %471 = vmatprep.subr.mxu0 0.0
        %472 = vmatpush1.msra.mxu0 %v357
        %473 = vmatprep.subr.mxu0 0.0
        %474 = vmatpush1.msra.mxu0 %v356
        %475 = vmatprep.subr.mxu0 0.0
        %476 = vmatpush1.msra.mxu0 %v355
        %477 = vmatprep.subr.mxu0 0.0
        %478 = vmatpush1.msra.mxu0 %v354
        %479 = vmatprep.subr.mxu0 0.0
        %480 = vmatpush1.msra.mxu0 %v353
        %481 = vmatprep.subr.mxu0 0.0
        %482 = vmatpush1.msra.mxu0 %v352
        %483 = vmatprep.subr.mxu0 0.0
        %484 = vmatpush1.msra.mxu0 %v351
        %485 = vmatprep.subr.mxu0 0.0
        %486 = vmatpush1.msra.mxu0 %v350
        %487 = vmatprep.subr.mxu0 0.0
        %488 = vmatpush2.msra.mxu0 0.0
        %489 = vmatprep.subr.mxu0 0.0
        %490 = vmatpush2.msra.mxu0 0.0
        %491 = vmatprep.subr.mxu0 0.0
        %492 = vmatpush2.msra.mxu0 0.0
        %493 = vmatprep.subr.mxu0 0.0
        %494 = vmatpush2.msra.mxu0 0.0
        %495 = vmatprep.subr.mxu0 0.0
        %496 = vmatpush2.msra.mxu0 0.0
        %497 = vmatprep.subr.mxu0 0.0
        %498 = vmatpush2.msra.mxu0 0.0
        %499 = vmatprep.subr.mxu0 0.0
        %500 = vmatpush2.msra.mxu0 0.0
        %501 = vmatprep.subr.mxu0 0.0
        %502 = vmatpush2.msra.mxu0 0.0
        %503 = vmatprep.subr.mxu0 0.0
        %504 = vmatpush2.msra.mxu0 0.0
        %505 = vmatprep.subr.mxu0 0.0
        %506 = vmatpush2.msra.mxu0 0.0
        %507 = vmatprep.subr.mxu0 0.0
        %508 = vmatpush2.msra.mxu0 0.0
        %509 = vmatprep.subr.mxu0 0.0
        %510 = vmatpush2.msra.mxu0 0.0
        %511 = vmatprep.subr.mxu0 0.0
        %512 = vmatpush2.msra.mxu0 0.0
        %513 = vmatprep.subr.mxu0 0.0
        %514 = vmatpush2.msra.mxu0 0.0
        %515 = vmatprep.subr.mxu0 0.0
        %516 = vmatpush2.msra.mxu0 0.0
        %517 = vmatprep.subr.mxu0 0.0
        %518 = vmatpush2.msra.mxu0 0.0
        %519 = vmatprep.mubr.f32.mxu0 0.0
        %520 = vmatmul.mubr.f32.gmra.mxu0 %v454
        %v521 = vpop.f32.mrf.mxu0
        %v522 = vadd.f32 0.0, %v521
        %v523 = vpop.f32.mrf.mxu0
        %524 = vdwg.mxu0
        %525 = vmatprep.subr.mxu0 0.0
        %526 = vmatpush1.msra.mxu0 %v349
        %527 = vmatprep.subr.mxu0 0.0
        %528 = vmatpush1.msra.mxu0 %v348
        %529 = vmatprep.subr.mxu0 0.0
        %530 = vmatpush1.msra.mxu0 %v347
        %531 = vmatprep.subr.mxu0 0.0
        %532 = vmatpush1.msra.mxu0 %v346
        %533 = vmatprep.subr.mxu0 0.0
        %534 = vmatpush1.msra.mxu0 %v345
        %535 = vmatprep.subr.mxu0 0.0
        %536 = vmatpush1.msra.mxu0 %v344
        %537 = vmatprep.subr.mxu0 0.0
        %538 = vmatpush1.msra.mxu0 %v343
        %539 = vmatprep.subr.mxu0 0.0
        %540 = vmatpush1.msra.mxu0 %v342
        %541 = vmatprep.subr.mxu0 0.0
        %542 = vmatpush1.msra.mxu0 %v341
        %543 = vmatprep.subr.mxu0 0.0
        %544 = vmatpush1.msra.mxu0 %v340
        %545 = vmatprep.subr.mxu0 0.0
        %546 = vmatpush1.msra.mxu0 %v339
        %547 = vmatprep.subr.mxu0 0.0
        %548 = vmatpush1.msra.mxu0 %v338
        %549 = vmatprep.subr.mxu0 0.0
        %550 = vmatpush1.msra.mxu0 %v337
        %551 = vmatprep.subr.mxu0 0.0
        %552 = vmatpush1.msra.mxu0 %v336
        %553 = vmatprep.subr.mxu0 0.0
        %554 = vmatpush1.msra.mxu0 %v335
        %555 = vmatprep.subr.mxu0 0.0
        %556 = vmatpush1.msra.mxu0 %v334
        %557 = vmatprep.subr.mxu0 0.0
        %558 = vmatpush2.msra.mxu0 0.0
        %559 = vmatprep.subr.mxu0 0.0
        %560 = vmatpush2.msra.mxu0 0.0
        %561 = vmatprep.subr.mxu0 0.0
        %562 = vmatpush2.msra.mxu0 0.0
        %563 = vmatprep.subr.mxu0 0.0
        %564 = vmatpush2.msra.mxu0 0.0
        %565 = vmatprep.subr.mxu0 0.0
        %566 = vmatpush2.msra.mxu0 0.0
        %567 = vmatprep.subr.mxu0 0.0
        %568 = vmatpush2.msra.mxu0 0.0
        %569 = vmatprep.subr.mxu0 0.0
        %570 = vmatpush2.msra.mxu0 0.0
        %571 = vmatprep.subr.mxu0 0.0
        %572 = vmatpush2.msra.mxu0 0.0
        %573 = vmatprep.subr.mxu0 0.0
        %574 = vmatpush2.msra.mxu0 0.0
        %575 = vmatprep.subr.mxu0 0.0
        %576 = vmatpush2.msra.mxu0 0.0
        %577 = vmatprep.subr.mxu0 0.0
        %578 = vmatpush2.msra.mxu0 0.0
        %579 = vmatprep.subr.mxu0 0.0
        %580 = vmatpush2.msra.mxu0 0.0
        %581 = vmatprep.subr.mxu0 0.0
        %582 = vmatpush2.msra.mxu0 0.0
        %583 = vmatprep.subr.mxu0 0.0
        %584 = vmatpush2.msra.mxu0 0.0
        %585 = vmatprep.subr.mxu0 0.0
        %586 = vmatpush2.msra.mxu0 0.0
        %587 = vmatprep.subr.mxu0 0.0
        %588 = vmatpush2.msra.mxu0 0.0
        %589 = vmatprep.mubr.f32.mxu0 0.0
        %590 = vmatmul.mubr.f32.gmra.mxu0 %v453
        %v591 = vpop.f32.mrf.mxu0
        %v592 = vadd.f32 %v522, %v591
        %v593 = vpop.f32.mrf.mxu0
        %594 = vdwg.mxu0
        %v596 = vrot.slane %v382, 1
        %v598 = vadd.f32 %v592, %v596
        %v599 = vmax.f32 %v598, 0.0
        %v600 = vrot.slane %v382, 2
        %602 = vmatprep.subr.mxu0 0.0
        %603 = vmatpush1.msra.mxu0 %v381
        %604 = vmatprep.subr.mxu0 0.0
        %605 = vmatpush1.msra.mxu0 %v380
        %606 = vmatprep.subr.mxu0 0.0
        %607 = vmatpush1.msra.mxu0 %v379
        %608 = vmatprep.subr.mxu0 0.0
        %609 = vmatpush1.msra.mxu0 %v378
        %610 = vmatprep.subr.mxu0 0.0
        %611 = vmatpush1.msra.mxu0 %v377
        %612 = vmatprep.subr.mxu0 0.0
        %613 = vmatpush1.msra.mxu0 %v376
        %614 = vmatprep.subr.mxu0 0.0
        %615 = vmatpush1.msra.mxu0 %v375
        %616 = vmatprep.subr.mxu0 0.0
        %617 = vmatpush1.msra.mxu0 %v374
        %618 = vmatprep.subr.mxu0 0.0
        %619 = vmatpush1.msra.mxu0 %v373
        %620 = vmatprep.subr.mxu0 0.0
        %621 = vmatpush1.msra.mxu0 %v372
        %622 = vmatprep.subr.mxu0 0.0
        %623 = vmatpush1.msra.mxu0 %v371
        %624 = vmatprep.subr.mxu0 0.0
        %625 = vmatpush1.msra.mxu0 %v370
        %626 = vmatprep.subr.mxu0 0.0
        %627 = vmatpush1.msra.mxu0 %v369
        %628 = vmatprep.subr.mxu0 0.0
        %629 = vmatpush1.msra.mxu0 %v368
        %630 = vmatprep.subr.mxu0 0.0
        %631 = vmatpush1.msra.mxu0 %v367
        %632 = vmatprep.subr.mxu0 0.0
        %633 = vmatpush1.msra.mxu0 %v366
        %634 = vmatprep.subr.mxu0 0.0
        %635 = vmatpush2.msra.mxu0 0.0
        %636 = vmatprep.subr.mxu0 0.0
        %637 = vmatpush2.msra.mxu0 0.0
        %638 = vmatprep.subr.mxu0 0.0
        %639 = vmatpush2.msra.mxu0 0.0
        %640 = vmatprep.subr.mxu0 0.0
        %641 = vmatpush2.msra.mxu0 0.0
        %642 = vmatprep.subr.mxu0 0.0
        %643 = vmatpush2.msra.mxu0 0.0
        %644 = vmatprep.subr.mxu0 0.0
        %645 = vmatpush2.msra.mxu0 0.0
        %646 = vmatprep.subr.mxu0 0.0
        %647 = vmatpush2.msra.mxu0 0.0
        %648 = vmatprep.subr.mxu0 0.0
        %649 = vmatpush2.msra.mxu0 0.0
        %650 = vmatprep.subr.mxu0 0.0
        %651 = vmatpush2.msra.mxu0 0.0
        %652 = vmatprep.subr.mxu0 0.0
        %653 = vmatpush2.msra.mxu0 0.0
        %654 = vmatprep.subr.mxu0 0.0
        %655 = vmatpush2.msra.mxu0 0.0
        %656 = vmatprep.subr.mxu0 0.0
        %657 = vmatpush2.msra.mxu0 0.0
        %658 = vmatprep.subr.mxu0 0.0
        %659 = vmatpush2.msra.mxu0 0.0
        %660 = vmatprep.subr.mxu0 0.0
        %661 = vmatpush2.msra.mxu0 0.0
        %662 = vmatprep.subr.mxu0 0.0
        %663 = vmatpush2.msra.mxu0 0.0
        %664 = vmatprep.subr.mxu0 0.0
        %665 = vmatpush2.msra.mxu0 0.0
        %666 = vmatprep.mubr.f32.mxu0 0.0
        %667 = vmatmul.mubr.f32.gmra.mxu0 %v599
        %v668 = vpop.f32.mrf.mxu0
        %v669 = vadd.f32 %v600, %v668
        %v670 = vpop.f32.mrf.mxu0
        %671 = vdwg.mxu0
        %v672 = vxor.u32 %v669, 2147483648
        %v673 = vmul.f32 %v672, 1.442695
        %v674 = vpow.pop %v673
        %v675 = vadd.f32 %v674, 1.0
        %v676 = vrcp.pop %v675
        %v677 = vmul.f32 1.0, %v676
        %v678 = vmul.f32 %v677, %v454
        %v679 = vadd.f32 %v453, %v678
        %v680 = vrot.slane %v382, 3
        %v682 = vmul.f32 %v679, %v680
        %v683 = vrot.slane %v382, 4
        %v685 = vadd.f32 %v682, %v683
        %686 = vst [vmem:[%s316] sm:$0x1] %v685
        %s687 = scalar_lea.vmem [#allocation2], 128
        %v688 = vld [vmem:[%s687] sm:$0xff]
        %v689 = vld [vmem:[%s687 + $0x8] sm:$0xff]
        %v690 = vld [vmem:[%s687 + $0x10] sm:$0xff]
        %v691 = vld [vmem:[%s687 + $0x18] sm:$0xff]
        %v692 = vld [vmem:[%s687 + $0x20] sm:$0xff]
        %v693 = vld [vmem:[%s687 + $0x28] sm:$0xff]
        %v694 = vld [vmem:[%s687 + $0x30] sm:$0xff]
        %v695 = vld [vmem:[%s687 + $0x38] sm:$0xff]
        %v696 = vld [vmem:[%s687 + $0x40] sm:$0xff]
        %v697 = vld [vmem:[%s687 + $0x48] sm:$0xff]
        %v698 = vld [vmem:[%s687 + $0x50] sm:$0xff]
        %v699 = vld [vmem:[%s687 + $0x58] sm:$0xff]
        %v700 = vld [vmem:[%s687 + $0x60] sm:$0xff]
        %v701 = vld [vmem:[%s687 + $0x68] sm:$0xff]
        %v702 = vld [vmem:[%s687 + $0x70] sm:$0xff]
        %v703 = vld [vmem:[%s687 + $0x78] sm:$0xff]
        %s704 = scalar_lea.vmem [#allocation4], 128
        %v705 = vld [vmem:[%s704] sm:$0xff]
        %v706 = vld [vmem:[%s704 + $0x8] sm:$0xff]
        %v707 = vld [vmem:[%s704 + $0x10] sm:$0xff]
        %v708 = vld [vmem:[%s704 + $0x18] sm:$0xff]
        %v709 = vld [vmem:[%s704 + $0x20] sm:$0xff]
        %v710 = vld [vmem:[%s704 + $0x28] sm:$0xff]
        %v711 = vld [vmem:[%s704 + $0x30] sm:$0xff]
        %v712 = vld [vmem:[%s704 + $0x38] sm:$0xff]
        %v713 = vld [vmem:[%s704 + $0x40] sm:$0xff]
        %v714 = vld [vmem:[%s704 + $0x48] sm:$0xff]
        %v715 = vld [vmem:[%s704 + $0x50] sm:$0xff]
        %v716 = vld [vmem:[%s704 + $0x58] sm:$0xff]
        %v717 = vld [vmem:[%s704 + $0x60] sm:$0xff]
        %v718 = vld [vmem:[%s704 + $0x68] sm:$0xff]
        %v719 = vld [vmem:[%s704 + $0x70] sm:$0xff]
        %v720 = vld [vmem:[%s704 + $0x78] sm:$0xff]
        %s721 = scalar_lea.vmem [#allocation6], 128
        %v722 = vld [vmem:[%s721] sm:$0xff]
        %v723 = vld [vmem:[%s721 + $0x8] sm:$0xff]
        %v724 = vld [vmem:[%s721 + $0x10] sm:$0xff]
        %v725 = vld [vmem:[%s721 + $0x18] sm:$0xff]
        %v726 = vld [vmem:[%s721 + $0x20] sm:$0xff]
        %v727 = vld [vmem:[%s721 + $0x28] sm:$0xff]
        %v728 = vld [vmem:[%s721 + $0x30] sm:$0xff]
        %v729 = vld [vmem:[%s721 + $0x38] sm:$0xff]
        %v730 = vld [vmem:[%s721 + $0x40] sm:$0xff]
        %v731 = vld [vmem:[%s721 + $0x48] sm:$0xff]
        %v732 = vld [vmem:[%s721 + $0x50] sm:$0xff]
        %v733 = vld [vmem:[%s721 + $0x58] sm:$0xff]
        %v734 = vld [vmem:[%s721 + $0x60] sm:$0xff]
        %v735 = vld [vmem:[%s721 + $0x68] sm:$0xff]
        %v736 = vld [vmem:[%s721 + $0x70] sm:$0xff]
        %v737 = vld [vmem:[%s721 + $0x78] sm:$0xff]
        %s738 = scalar_lea.vmem [#allocation7], 128
        %v739 = vld [vmem:[%s738] sm:$0xff]
        %v740 = vld [vmem:[%s738 + $0x8] sm:$0xff]
        %v741 = vld [vmem:[%s738 + $0x10] sm:$0xff]
        %v742 = vld [vmem:[%s738 + $0x18] sm:$0xff]
        %v743 = vld [vmem:[%s738 + $0x20] sm:$0xff]
        %v744 = vld [vmem:[%s738 + $0x28] sm:$0xff]
        %v745 = vld [vmem:[%s738 + $0x30] sm:$0xff]
        %v746 = vld [vmem:[%s738 + $0x38] sm:$0xff]
        %v747 = vld [vmem:[%s738 + $0x40] sm:$0xff]
        %v748 = vld [vmem:[%s738 + $0x48] sm:$0xff]
        %v749 = vld [vmem:[%s738 + $0x50] sm:$0xff]
        %v750 = vld [vmem:[%s738 + $0x58] sm:$0xff]
        %v751 = vld [vmem:[%s738 + $0x60] sm:$0xff]
        %v752 = vld [vmem:[%s738 + $0x68] sm:$0xff]
        %v753 = vld [vmem:[%s738 + $0x70] sm:$0xff]
        %v754 = vld [vmem:[%s738 + $0x78] sm:$0xff]
        %s755 = scalar_lea.vmem [#allocation9], 8
        %v756 = vld [vmem:[%s755] sm:$0xff]
        %757 = vmatprep.subr.mxu0 0.0
        %758 = vmatpush1.msra.mxu0 %v703
        %759 = vmatprep.subr.mxu0 0.0
        %760 = vmatpush1.msra.mxu0 %v702
        %761 = vmatprep.subr.mxu0 0.0
        %762 = vmatpush1.msra.mxu0 %v701
        %763 = vmatprep.subr.mxu0 0.0
        %764 = vmatpush1.msra.mxu0 %v700
        %765 = vmatprep.subr.mxu0 0.0
        %766 = vmatpush1.msra.mxu0 %v699
        %767 = vmatprep.subr.mxu0 0.0
        %768 = vmatpush1.msra.mxu0 %v698
        %769 = vmatprep.subr.mxu0 0.0
        %770 = vmatpush1.msra.mxu0 %v697
        %771 = vmatprep.subr.mxu0 0.0
        %772 = vmatpush1.msra.mxu0 %v696
        %773 = vmatprep.subr.mxu0 0.0
        %774 = vmatpush1.msra.mxu0 %v695
        %775 = vmatprep.subr.mxu0 0.0
        %776 = vmatpush1.msra.mxu0 %v694
        %777 = vmatprep.subr.mxu0 0.0
        %778 = vmatpush1.msra.mxu0 %v693
        %779 = vmatprep.subr.mxu0 0.0
        %780 = vmatpush1.msra.mxu0 %v692
        %781 = vmatprep.subr.mxu0 0.0
        %782 = vmatpush1.msra.mxu0 %v691
        %783 = vmatprep.subr.mxu0 0.0
        %784 = vmatpush1.msra.mxu0 %v690
        %785 = vmatprep.subr.mxu0 0.0
        %786 = vmatpush1.msra.mxu0 %v689
        %787 = vmatprep.subr.mxu0 0.0
        %788 = vmatpush1.msra.mxu0 %v688
        %789 = vmatprep.subr.mxu0 0.0
        %790 = vmatpush2.msra.mxu0 0.0
        %791 = vmatprep.subr.mxu0 0.0
        %792 = vmatpush2.msra.mxu0 0.0
        %793 = vmatprep.subr.mxu0 0.0
        %794 = vmatpush2.msra.mxu0 0.0
        %795 = vmatprep.subr.mxu0 0.0
        %796 = vmatpush2.msra.mxu0 0.0
        %797 = vmatprep.subr.mxu0 0.0
        %798 = vmatpush2.msra.mxu0 0.0
        %799 = vmatprep.subr.mxu0 0.0
        %800 = vmatpush2.msra.mxu0 0.0
        %801 = vmatprep.subr.mxu0 0.0
        %802 = vmatpush2.msra.mxu0 0.0
        %803 = vmatprep.subr.mxu0 0.0
        %804 = vmatpush2.msra.mxu0 0.0
        %805 = vmatprep.subr.mxu0 0.0
        %806 = vmatpush2.msra.mxu0 0.0
        %807 = vmatprep.subr.mxu0 0.0
        %808 = vmatpush2.msra.mxu0 0.0
        %809 = vmatprep.subr.mxu0 0.0
        %810 = vmatpush2.msra.mxu0 0.0
        %811 = vmatprep.subr.mxu0 0.0
        %812 = vmatpush2.msra.mxu0 0.0
        %813 = vmatprep.subr.mxu0 0.0
        %814 = vmatpush2.msra.mxu0 0.0
        %815 = vmatprep.subr.mxu0 0.0
        %816 = vmatpush2.msra.mxu0 0.0
        %817 = vmatprep.subr.mxu0 0.0
        %818 = vmatpush2.msra.mxu0 0.0
        %819 = vmatprep.subr.mxu0 0.0
        %820 = vmatpush2.msra.mxu0 0.0
        %821 = vmatprep.mubr.f32.mxu0 0.0
        %822 = vmatmul.mubr.f32.gmra.mxu0 %v685
        %v823 = vpop.f32.mrf.mxu0
        %v824 = vadd.f32 %v756, %v823
        %v825 = vpop.f32.mrf.mxu0
        %826 = vdwg.mxu0
        %v827 = vmax.f32 %v824, 0.0
        %v828 = vmin.f32 %v824, 0.0
        %829 = vmatprep.subr.mxu0 0.0
        %830 = vmatpush1.msra.mxu0 %v737
        %831 = vmatprep.subr.mxu0 0.0
        %832 = vmatpush1.msra.mxu0 %v736
        %833 = vmatprep.subr.mxu0 0.0
        %834 = vmatpush1.msra.mxu0 %v735
        %835 = vmatprep.subr.mxu0 0.0
        %836 = vmatpush1.msra.mxu0 %v734
        %837 = vmatprep.subr.mxu0 0.0
        %838 = vmatpush1.msra.mxu0 %v733
        %839 = vmatprep.subr.mxu0 0.0
        %840 = vmatpush1.msra.mxu0 %v732
        %841 = vmatprep.subr.mxu0 0.0
        %842 = vmatpush1.msra.mxu0 %v731
        %843 = vmatprep.subr.mxu0 0.0
        %844 = vmatpush1.msra.mxu0 %v730
        %845 = vmatprep.subr.mxu0 0.0
        %846 = vmatpush1.msra.mxu0 %v729
        %847 = vmatprep.subr.mxu0 0.0
        %848 = vmatpush1.msra.mxu0 %v728
        %849 = vmatprep.subr.mxu0 0.0
        %850 = vmatpush1.msra.mxu0 %v727
        %851 = vmatprep.subr.mxu0 0.0
        %852 = vmatpush1.msra.mxu0 %v726
        %853 = vmatprep.subr.mxu0 0.0
        %854 = vmatpush1.msra.mxu0 %v725
        %855 = vmatprep.subr.mxu0 0.0
        %856 = vmatpush1.msra.mxu0 %v724
        %857 = vmatprep.subr.mxu0 0.0
        %858 = vmatpush1.msra.mxu0 %v723
        %859 = vmatprep.subr.mxu0 0.0
        %860 = vmatpush1.msra.mxu0 %v722
        %861 = vmatprep.subr.mxu0 0.0
        %862 = vmatpush2.msra.mxu0 0.0
        %863 = vmatprep.subr.mxu0 0.0
        %864 = vmatpush2.msra.mxu0 0.0
        %865 = vmatprep.subr.mxu0 0.0
        %866 = vmatpush2.msra.mxu0 0.0
        %867 = vmatprep.subr.mxu0 0.0
        %868 = vmatpush2.msra.mxu0 0.0
        %869 = vmatprep.subr.mxu0 0.0
        %870 = vmatpush2.msra.mxu0 0.0
        %871 = vmatprep.subr.mxu0 0.0
        %872 = vmatpush2.msra.mxu0 0.0
        %873 = vmatprep.subr.mxu0 0.0
        %874 = vmatpush2.msra.mxu0 0.0
        %875 = vmatprep.subr.mxu0 0.0
        %876 = vmatpush2.msra.mxu0 0.0
        %877 = vmatprep.subr.mxu0 0.0
        %878 = vmatpush2.msra.mxu0 0.0
        %879 = vmatprep.subr.mxu0 0.0
        %880 = vmatpush2.msra.mxu0 0.0
        %881 = vmatprep.subr.mxu0 0.0
        %882 = vmatpush2.msra.mxu0 0.0
        %883 = vmatprep.subr.mxu0 0.0
        %884 = vmatpush2.msra.mxu0 0.0
        %885 = vmatprep.subr.mxu0 0.0
        %886 = vmatpush2.msra.mxu0 0.0
        %887 = vmatprep.subr.mxu0 0.0
        %888 = vmatpush2.msra.mxu0 0.0
        %889 = vmatprep.subr.mxu0 0.0
        %890 = vmatpush2.msra.mxu0 0.0
        %891 = vmatprep.subr.mxu0 0.0
        %892 = vmatpush2.msra.mxu0 0.0
        %893 = vmatprep.mubr.f32.mxu0 0.0
        %894 = vmatmul.mubr.f32.gmra.mxu0 %v828
        %v895 = vpop.f32.mrf.mxu0
        %v896 = vadd.f32 0.0, %v895
        %v897 = vpop.f32.mrf.mxu0
        %898 = vdwg.mxu0
        %899 = vmatprep.subr.mxu0 0.0
        %900 = vmatpush1.msra.mxu0 %v720
        %901 = vmatprep.subr.mxu0 0.0
        %902 = vmatpush1.msra.mxu0 %v719
        %903 = vmatprep.subr.mxu0 0.0
        %904 = vmatpush1.msra.mxu0 %v718
        %905 = vmatprep.subr.mxu0 0.0
        %906 = vmatpush1.msra.mxu0 %v717
        %907 = vmatprep.subr.mxu0 0.0
        %908 = vmatpush1.msra.mxu0 %v716
        %909 = vmatprep.subr.mxu0 0.0
        %910 = vmatpush1.msra.mxu0 %v715
        %911 = vmatprep.subr.mxu0 0.0
        %912 = vmatpush1.msra.mxu0 %v714
        %913 = vmatprep.subr.mxu0 0.0
        %914 = vmatpush1.msra.mxu0 %v713
        %915 = vmatprep.subr.mxu0 0.0
        %916 = vmatpush1.msra.mxu0 %v712
        %917 = vmatprep.subr.mxu0 0.0
        %918 = vmatpush1.msra.mxu0 %v711
        %919 = vmatprep.subr.mxu0 0.0
        %920 = vmatpush1.msra.mxu0 %v710
        %921 = vmatprep.subr.mxu0 0.0
        %922 = vmatpush1.msra.mxu0 %v709
        %923 = vmatprep.subr.mxu0 0.0
        %924 = vmatpush1.msra.mxu0 %v708
        %925 = vmatprep.subr.mxu0 0.0
        %926 = vmatpush1.msra.mxu0 %v707
        %927 = vmatprep.subr.mxu0 0.0
        %928 = vmatpush1.msra.mxu0 %v706
        %929 = vmatprep.subr.mxu0 0.0
        %930 = vmatpush1.msra.mxu0 %v705
        %931 = vmatprep.subr.mxu0 0.0
        %932 = vmatpush2.msra.mxu0 0.0
        %933 = vmatprep.subr.mxu0 0.0
        %934 = vmatpush2.msra.mxu0 0.0
        %935 = vmatprep.subr.mxu0 0.0
        %936 = vmatpush2.msra.mxu0 0.0
        %937 = vmatprep.subr.mxu0 0.0
        %938 = vmatpush2.msra.mxu0 0.0
        %939 = vmatprep.subr.mxu0 0.0
        %940 = vmatpush2.msra.mxu0 0.0
        %941 = vmatprep.subr.mxu0 0.0
        %942 = vmatpush2.msra.mxu0 0.0
        %943 = vmatprep.subr.mxu0 0.0
        %944 = vmatpush2.msra.mxu0 0.0
        %945 = vmatprep.subr.mxu0 0.0
        %946 = vmatpush2.msra.mxu0 0.0
        %947 = vmatprep.subr.mxu0 0.0
        %948 = vmatpush2.msra.mxu0 0.0
        %949 = vmatprep.subr.mxu0 0.0
        %950 = vmatpush2.msra.mxu0 0.0
        %951 = vmatprep.subr.mxu0 0.0
        %952 = vmatpush2.msra.mxu0 0.0
        %953 = vmatprep.subr.mxu0 0.0
        %954 = vmatpush2.msra.mxu0 0.0
        %955 = vmatprep.subr.mxu0 0.0
        %956 = vmatpush2.msra.mxu0 0.0
        %957 = vmatprep.subr.mxu0 0.0
        %958 = vmatpush2.msra.mxu0 0.0
        %959 = vmatprep.subr.mxu0 0.0
        %960 = vmatpush2.msra.mxu0 0.0
        %961 = vmatprep.subr.mxu0 0.0
        %962 = vmatpush2.msra.mxu0 0.0
        %963 = vmatprep.mubr.f32.mxu0 0.0
        %964 = vmatmul.mubr.f32.gmra.mxu0 %v827
        %v965 = vpop.f32.mrf.mxu0
        %v966 = vadd.f32 %v896, %v965
        %v967 = vpop.f32.mrf.mxu0
        %968 = vdwg.mxu0
        %v970 = vrot.slane %v756, 1
        %v972 = vadd.f32 %v966, %v970
        %v973 = vmax.f32 %v972, 0.0
        %v974 = vrot.slane %v756, 2
        %976 = vmatprep.subr.mxu0 0.0
        %977 = vmatpush1.msra.mxu0 %v754
        %978 = vmatprep.subr.mxu0 0.0
        %979 = vmatpush1.msra.mxu0 %v753
        %980 = vmatprep.subr.mxu0 0.0
        %981 = vmatpush1.msra.mxu0 %v752
        %982 = vmatprep.subr.mxu0 0.0
        %983 = vmatpush1.msra.mxu0 %v751
        %984 = vmatprep.subr.mxu0 0.0
        %985 = vmatpush1.msra.mxu0 %v750
        %986 = vmatprep.subr.mxu0 0.0
        %987 = vmatpush1.msra.mxu0 %v749
        %988 = vmatprep.subr.mxu0 0.0
        %989 = vmatpush1.msra.mxu0 %v748
        %990 = vmatprep.subr.mxu0 0.0
        %991 = vmatpush1.msra.mxu0 %v747
        %992 = vmatprep.subr.mxu0 0.0
        %993 = vmatpush1.msra.mxu0 %v746
        %994 = vmatprep.subr.mxu0 0.0
        %995 = vmatpush1.msra.mxu0 %v745
        %996 = vmatprep.subr.mxu0 0.0
        %997 = vmatpush1.msra.mxu0 %v744
        %998 = vmatprep.subr.mxu0 0.0
        %999 = vmatpush1.msra.mxu0 %v743
        %1000 = vmatprep.subr.mxu0 0.0
        %1001 = vmatpush1.msra.mxu0 %v742
        %1002 = vmatprep.subr.mxu0 0.0
        %1003 = vmatpush1.msra.mxu0 %v741
        %1004 = vmatprep.subr.mxu0 0.0
        %1005 = vmatpush1.msra.mxu0 %v740
        %1006 = vmatprep.subr.mxu0 0.0
        %1007 = vmatpush1.msra.mxu0 %v739
        %1008 = vmatprep.subr.mxu0 0.0
        %1009 = vmatpush2.msra.mxu0 0.0
        %1010 = vmatprep.subr.mxu0 0.0
        %1011 = vmatpush2.msra.mxu0 0.0
        %1012 = vmatprep.subr.mxu0 0.0
        %1013 = vmatpush2.msra.mxu0 0.0
        %1014 = vmatprep.subr.mxu0 0.0
        %1015 = vmatpush2.msra.mxu0 0.0
        %1016 = vmatprep.subr.mxu0 0.0
        %1017 = vmatpush2.msra.mxu0 0.0
        %1018 = vmatprep.subr.mxu0 0.0
        %1019 = vmatpush2.msra.mxu0 0.0
        %1020 = vmatprep.subr.mxu0 0.0
        %1021 = vmatpush2.msra.mxu0 0.0
        %1022 = vmatprep.subr.mxu0 0.0
        %1023 = vmatpush2.msra.mxu0 0.0
        %1024 = vmatprep.subr.mxu0 0.0
        %1025 = vmatpush2.msra.mxu0 0.0
        %1026 = vmatprep.subr.mxu0 0.0
        %1027 = vmatpush2.msra.mxu0 0.0
        %1028 = vmatprep.subr.mxu0 0.0
        %1029 = vmatpush2.msra.mxu0 0.0
        %1030 = vmatprep.subr.mxu0 0.0
        %1031 = vmatpush2.msra.mxu0 0.0
        %1032 = vmatprep.subr.mxu0 0.0
        %1033 = vmatpush2.msra.mxu0 0.0
        %1034 = vmatprep.subr.mxu0 0.0
        %1035 = vmatpush2.msra.mxu0 0.0
        %1036 = vmatprep.subr.mxu0 0.0
        %1037 = vmatpush2.msra.mxu0 0.0
        %1038 = vmatprep.subr.mxu0 0.0
        %1039 = vmatpush2.msra.mxu0 0.0
        %1040 = vmatprep.mubr.f32.mxu0 0.0
        %1041 = vmatmul.mubr.f32.gmra.mxu0 %v973
        %v1042 = vpop.f32.mrf.mxu0
        %v1043 = vadd.f32 %v974, %v1042
        %v1044 = vpop.f32.mrf.mxu0
        %1045 = vdwg.mxu0
        %v1046 = vxor.u32 %v1043, 2147483648
        %v1047 = vmul.f32 %v1046, 1.442695
        %v1048 = vpow.pop %v1047
        %v1049 = vadd.f32 %v1048, 1.0
        %v1050 = vrcp.pop %v1049
        %v1051 = vmul.f32 1.0, %v1050
        %v1052 = vmul.f32 %v1051, %v828
        %v1053 = vadd.f32 %v827, %v1052
        %v1054 = vrot.slane %v756, 3
        %v1056 = vmul.f32 %v1053, %v1054
        %v1057 = vrot.slane %v756, 4
        %v1059 = vadd.f32 %v1056, %v1057
        %1060 = vst [vmem:[%s316 + $0x1] sm:$0x1] %v1059
        %s1061 = scalar_lea.vmem [#allocation2], 256
        %v1062 = vld [vmem:[%s1061] sm:$0xff]
        %v1063 = vld [vmem:[%s1061 + $0x8] sm:$0xff]
        %v1064 = vld [vmem:[%s1061 + $0x10] sm:$0xff]
        %v1065 = vld [vmem:[%s1061 + $0x18] sm:$0xff]
        %v1066 = vld [vmem:[%s1061 + $0x20] sm:$0xff]
        %v1067 = vld [vmem:[%s1061 + $0x28] sm:$0xff]
        %v1068 = vld [vmem:[%s1061 + $0x30] sm:$0xff]
        %v1069 = vld [vmem:[%s1061 + $0x38] sm:$0xff]
        %v1070 = vld [vmem:[%s1061 + $0x40] sm:$0xff]
        %v1071 = vld [vmem:[%s1061 + $0x48] sm:$0xff]
        %v1072 = vld [vmem:[%s1061 + $0x50] sm:$0xff]
        %v1073 = vld [vmem:[%s1061 + $0x58] sm:$0xff]
        %v1074 = vld [vmem:[%s1061 + $0x60] sm:$0xff]
        %v1075 = vld [vmem:[%s1061 + $0x68] sm:$0xff]
        %v1076 = vld [vmem:[%s1061 + $0x70] sm:$0xff]
        %v1077 = vld [vmem:[%s1061 + $0x78] sm:$0xff]
        %s1078 = scalar_lea.vmem [#allocation4], 256
        %v1079 = vld [vmem:[%s1078] sm:$0xff]
        %v1080 = vld [vmem:[%s1078 + $0x8] sm:$0xff]
        %v1081 = vld [vmem:[%s1078 + $0x10] sm:$0xff]
        %v1082 = vld [vmem:[%s1078 + $0x18] sm:$0xff]
        %v1083 = vld [vmem:[%s1078 + $0x20] sm:$0xff]
        %v1084 = vld [vmem:[%s1078 + $0x28] sm:$0xff]
        %v1085 = vld [vmem:[%s1078 + $0x30] sm:$0xff]
        %v1086 = vld [vmem:[%s1078 + $0x38] sm:$0xff]
        %v1087 = vld [vmem:[%s1078 + $0x40] sm:$0xff]
        %v1088 = vld [vmem:[%s1078 + $0x48] sm:$0xff]
        %v1089 = vld [vmem:[%s1078 + $0x50] sm:$0xff]
        %v1090 = vld [vmem:[%s1078 + $0x58] sm:$0xff]
        %v1091 = vld [vmem:[%s1078 + $0x60] sm:$0xff]
        %v1092 = vld [vmem:[%s1078 + $0x68] sm:$0xff]
        %v1093 = vld [vmem:[%s1078 + $0x70] sm:$0xff]
        %v1094 = vld [vmem:[%s1078 + $0x78] sm:$0xff]
        %s1095 = scalar_lea.vmem [#allocation6], 256
        %v1096 = vld [vmem:[%s1095] sm:$0xff]
        %v1097 = vld [vmem:[%s1095 + $0x8] sm:$0xff]
        %v1098 = vld [vmem:[%s1095 + $0x10] sm:$0xff]
        %v1099 = vld [vmem:[%s1095 + $0x18] sm:$0xff]
        %v1100 = vld [vmem:[%s1095 + $0x20] sm:$0xff]
        %v1101 = vld [vmem:[%s1095 + $0x28] sm:$0xff]
        %v1102 = vld [vmem:[%s1095 + $0x30] sm:$0xff]
        %v1103 = vld [vmem:[%s1095 + $0x38] sm:$0xff]
        %v1104 = vld [vmem:[%s1095 + $0x40] sm:$0xff]
        %v1105 = vld [vmem:[%s1095 + $0x48] sm:$0xff]
        %v1106 = vld [vmem:[%s1095 + $0x50] sm:$0xff]
        %v1107 = vld [vmem:[%s1095 + $0x58] sm:$0xff]
        %v1108 = vld [vmem:[%s1095 + $0x60] sm:$0xff]
        %v1109 = vld [vmem:[%s1095 + $0x68] sm:$0xff]
        %v1110 = vld [vmem:[%s1095 + $0x70] sm:$0xff]
        %v1111 = vld [vmem:[%s1095 + $0x78] sm:$0xff]
        %s1112 = scalar_lea.vmem [#allocation7], 256
        %v1113 = vld [vmem:[%s1112] sm:$0xff]
        %v1114 = vld [vmem:[%s1112 + $0x8] sm:$0xff]
        %v1115 = vld [vmem:[%s1112 + $0x10] sm:$0xff]
        %v1116 = vld [vmem:[%s1112 + $0x18] sm:$0xff]
        %v1117 = vld [vmem:[%s1112 + $0x20] sm:$0xff]
        %v1118 = vld [vmem:[%s1112 + $0x28] sm:$0xff]
        %v1119 = vld [vmem:[%s1112 + $0x30] sm:$0xff]
        %v1120 = vld [vmem:[%s1112 + $0x38] sm:$0xff]
        %v1121 = vld [vmem:[%s1112 + $0x40] sm:$0xff]
        %v1122 = vld [vmem:[%s1112 + $0x48] sm:$0xff]
        %v1123 = vld [vmem:[%s1112 + $0x50] sm:$0xff]
        %v1124 = vld [vmem:[%s1112 + $0x58] sm:$0xff]
        %v1125 = vld [vmem:[%s1112 + $0x60] sm:$0xff]
        %v1126 = vld [vmem:[%s1112 + $0x68] sm:$0xff]
        %v1127 = vld [vmem:[%s1112 + $0x70] sm:$0xff]
        %v1128 = vld [vmem:[%s1112 + $0x78] sm:$0xff]
        %s1129 = scalar_lea.vmem [#allocation9], 16
        %v1130 = vld [vmem:[%s1129] sm:$0xff]
        %1131 = vmatprep.subr.mxu0 0.0
        %1132 = vmatpush1.msra.mxu0 %v1077
        %1133 = vmatprep.subr.mxu0 0.0
        %1134 = vmatpush1.msra.mxu0 %v1076
        %1135 = vmatprep.subr.mxu0 0.0
        %1136 = vmatpush1.msra.mxu0 %v1075
        %1137 = vmatprep.subr.mxu0 0.0
        %1138 = vmatpush1.msra.mxu0 %v1074
        %1139 = vmatprep.subr.mxu0 0.0
        %1140 = vmatpush1.msra.mxu0 %v1073
        %1141 = vmatprep.subr.mxu0 0.0
        %1142 = vmatpush1.msra.mxu0 %v1072
        %1143 = vmatprep.subr.mxu0 0.0
        %1144 = vmatpush1.msra.mxu0 %v1071
        %1145 = vmatprep.subr.mxu0 0.0
        %1146 = vmatpush1.msra.mxu0 %v1070
        %1147 = vmatprep.subr.mxu0 0.0
        %1148 = vmatpush1.msra.mxu0 %v1069
        %1149 = vmatprep.subr.mxu0 0.0
        %1150 = vmatpush1.msra.mxu0 %v1068
        %1151 = vmatprep.subr.mxu0 0.0
        %1152 = vmatpush1.msra.mxu0 %v1067
        %1153 = vmatprep.subr.mxu0 0.0
        %1154 = vmatpush1.msra.mxu0 %v1066
        %1155 = vmatprep.subr.mxu0 0.0
        %1156 = vmatpush1.msra.mxu0 %v1065
        %1157 = vmatprep.subr.mxu0 0.0
        %1158 = vmatpush1.msra.mxu0 %v1064
        %1159 = vmatprep.subr.mxu0 0.0
        %1160 = vmatpush1.msra.mxu0 %v1063
        %1161 = vmatprep.subr.mxu0 0.0
        %1162 = vmatpush1.msra.mxu0 %v1062
        %1163 = vmatprep.subr.mxu0 0.0
        %1164 = vmatpush2.msra.mxu0 0.0
        %1165 = vmatprep.subr.mxu0 0.0
        %1166 = vmatpush2.msra.mxu0 0.0
        %1167 = vmatprep.subr.mxu0 0.0
        %1168 = vmatpush2.msra.mxu0 0.0
        %1169 = vmatprep.subr.mxu0 0.0
        %1170 = vmatpush2.msra.mxu0 0.0
        %1171 = vmatprep.subr.mxu0 0.0
        %1172 = vmatpush2.msra.mxu0 0.0
        %1173 = vmatprep.subr.mxu0 0.0
        %1174 = vmatpush2.msra.mxu0 0.0
        %1175 = vmatprep.subr.mxu0 0.0
        %1176 = vmatpush2.msra.mxu0 0.0
        %1177 = vmatprep.subr.mxu0 0.0
        %1178 = vmatpush2.msra.mxu0 0.0
        %1179 = vmatprep.subr.mxu0 0.0
        %1180 = vmatpush2.msra.mxu0 0.0
        %1181 = vmatprep.subr.mxu0 0.0
        %1182 = vmatpush2.msra.mxu0 0.0
        %1183 = vmatprep.subr.mxu0 0.0
        %1184 = vmatpush2.msra.mxu0 0.0
        %1185 = vmatprep.subr.mxu0 0.0
        %1186 = vmatpush2.msra.mxu0 0.0
        %1187 = vmatprep.subr.mxu0 0.0
        %1188 = vmatpush2.msra.mxu0 0.0
        %1189 = vmatprep.subr.mxu0 0.0
        %1190 = vmatpush2.msra.mxu0 0.0
        %1191 = vmatprep.subr.mxu0 0.0
        %1192 = vmatpush2.msra.mxu0 0.0
        %1193 = vmatprep.subr.mxu0 0.0
        %1194 = vmatpush2.msra.mxu0 0.0
        %1195 = vmatprep.mubr.f32.mxu0 0.0
        %1196 = vmatmul.mubr.f32.gmra.mxu0 %v1059
        %v1197 = vpop.f32.mrf.mxu0
        %v1198 = vadd.f32 %v1130, %v1197
        %v1199 = vpop.f32.mrf.mxu0
        %1200 = vdwg.mxu0
        %v1201 = vmax.f32 %v1198, 0.0
        %v1202 = vmin.f32 %v1198, 0.0
        %1203 = vmatprep.subr.mxu0 0.0
        %1204 = vmatpush1.msra.mxu0 %v1111
        %1205 = vmatprep.subr.mxu0 0.0
        %1206 = vmatpush1.msra.mxu0 %v1110
        %1207 = vmatprep.subr.mxu0 0.0
        %1208 = vmatpush1.msra.mxu0 %v1109
        %1209 = vmatprep.subr.mxu0 0.0
        %1210 = vmatpush1.msra.mxu0 %v1108
        %1211 = vmatprep.subr.mxu0 0.0
        %1212 = vmatpush1.msra.mxu0 %v1107
        %1213 = vmatprep.subr.mxu0 0.0
        %1214 = vmatpush1.msra.mxu0 %v1106
        %1215 = vmatprep.subr.mxu0 0.0
        %1216 = vmatpush1.msra.mxu0 %v1105
        %1217 = vmatprep.subr.mxu0 0.0
        %1218 = vmatpush1.msra.mxu0 %v1104
        %1219 = vmatprep.subr.mxu0 0.0
        %1220 = vmatpush1.msra.mxu0 %v1103
        %1221 = vmatprep.subr.mxu0 0.0
        %1222 = vmatpush1.msra.mxu0 %v1102
        %1223 = vmatprep.subr.mxu0 0.0
        %1224 = vmatpush1.msra.mxu0 %v1101
        %1225 = vmatprep.subr.mxu0 0.0
        %1226 = vmatpush1.msra.mxu0 %v1100
        %1227 = vmatprep.subr.mxu0 0.0
        %1228 = vmatpush1.msra.mxu0 %v1099
        %1229 = vmatprep.subr.mxu0 0.0
        %1230 = vmatpush1.msra.mxu0 %v1098
        %1231 = vmatprep.subr.mxu0 0.0
        %1232 = vmatpush1.msra.mxu0 %v1097
        %1233 = vmatprep.subr.mxu0 0.0
        %1234 = vmatpush1.msra.mxu0 %v1096
        %1235 = vmatprep.subr.mxu0 0.0
        %1236 = vmatpush2.msra.mxu0 0.0
        %1237 = vmatprep.subr.mxu0 0.0
        %1238 = vmatpush2.msra.mxu0 0.0
        %1239 = vmatprep.subr.mxu0 0.0
        %1240 = vmatpush2.msra.mxu0 0.0
        %1241 = vmatprep.subr.mxu0 0.0
        %1242 = vmatpush2.msra.mxu0 0.0
        %1243 = vmatprep.subr.mxu0 0.0
        %1244 = vmatpush2.msra.mxu0 0.0
        %1245 = vmatprep.subr.mxu0 0.0
        %1246 = vmatpush2.msra.mxu0 0.0
        %1247 = vmatprep.subr.mxu0 0.0
        %1248 = vmatpush2.msra.mxu0 0.0
        %1249 = vmatprep.subr.mxu0 0.0
        %1250 = vmatpush2.msra.mxu0 0.0
        %1251 = vmatprep.subr.mxu0 0.0
        %1252 = vmatpush2.msra.mxu0 0.0
        %1253 = vmatprep.subr.mxu0 0.0
        %1254 = vmatpush2.msra.mxu0 0.0
        %1255 = vmatprep.subr.mxu0 0.0
        %1256 = vmatpush2.msra.mxu0 0.0
        %1257 = vmatprep.subr.mxu0 0.0
        %1258 = vmatpush2.msra.mxu0 0.0
        %1259 = vmatprep.subr.mxu0 0.0
        %1260 = vmatpush2.msra.mxu0 0.0
        %1261 = vmatprep.subr.mxu0 0.0
        %1262 = vmatpush2.msra.mxu0 0.0
        %1263 = vmatprep.subr.mxu0 0.0
        %1264 = vmatpush2.msra.mxu0 0.0
        %1265 = vmatprep.subr.mxu0 0.0
        %1266 = vmatpush2.msra.mxu0 0.0
        %1267 = vmatprep.mubr.f32.mxu0 0.0
        %1268 = vmatmul.mubr.f32.gmra.mxu0 %v1202
        %v1269 = vpop.f32.mrf.mxu0
        %v1270 = vadd.f32 0.0, %v1269
        %v1271 = vpop.f32.mrf.mxu0
        %1272 = vdwg.mxu0
        %1273 = vmatprep.subr.mxu0 0.0
        %1274 = vmatpush1.msra.mxu0 %v1094
        %1275 = vmatprep.subr.mxu0 0.0
        %1276 = vmatpush1.msra.mxu0 %v1093
        %1277 = vmatprep.subr.mxu0 0.0
        %1278 = vmatpush1.msra.mxu0 %v1092
        %1279 = vmatprep.subr.mxu0 0.0
        %1280 = vmatpush1.msra.mxu0 %v1091
        %1281 = vmatprep.subr.mxu0 0.0
        %1282 = vmatpush1.msra.mxu0 %v1090
        %1283 = vmatprep.subr.mxu0 0.0
        %1284 = vmatpush1.msra.mxu0 %v1089
        %1285 = vmatprep.subr.mxu0 0.0
        %1286 = vmatpush1.msra.mxu0 %v1088
        %1287 = vmatprep.subr.mxu0 0.0
        %1288 = vmatpush1.msra.mxu0 %v1087
        %1289 = vmatprep.subr.mxu0 0.0
        %1290 = vmatpush1.msra.mxu0 %v1086
        %1291 = vmatprep.subr.mxu0 0.0
        %1292 = vmatpush1.msra.mxu0 %v1085
        %1293 = vmatprep.subr.mxu0 0.0
        %1294 = vmatpush1.msra.mxu0 %v1084
        %1295 = vmatprep.subr.mxu0 0.0
        %1296 = vmatpush1.msra.mxu0 %v1083
        %1297 = vmatprep.subr.mxu0 0.0
        %1298 = vmatpush1.msra.mxu0 %v1082
        %1299 = vmatprep.subr.mxu0 0.0
        %1300 = vmatpush1.msra.mxu0 %v1081
        %1301 = vmatprep.subr.mxu0 0.0
        %1302 = vmatpush1.msra.mxu0 %v1080
        %1303 = vmatprep.subr.mxu0 0.0
        %1304 = vmatpush1.msra.mxu0 %v1079
        %1305 = vmatprep.subr.mxu0 0.0
        %1306 = vmatpush2.msra.mxu0 0.0
        %1307 = vmatprep.subr.mxu0 0.0
        %1308 = vmatpush2.msra.mxu0 0.0
        %1309 = vmatprep.subr.mxu0 0.0
        %1310 = vmatpush2.msra.mxu0 0.0
        %1311 = vmatprep.subr.mxu0 0.0
        %1312 = vmatpush2.msra.mxu0 0.0
        %1313 = vmatprep.subr.mxu0 0.0
        %1314 = vmatpush2.msra.mxu0 0.0
        %1315 = vmatprep.subr.mxu0 0.0
        %1316 = vmatpush2.msra.mxu0 0.0
        %1317 = vmatprep.subr.mxu0 0.0
        %1318 = vmatpush2.msra.mxu0 0.0
        %1319 = vmatprep.subr.mxu0 0.0
        %1320 = vmatpush2.msra.mxu0 0.0
        %1321 = vmatprep.subr.mxu0 0.0
        %1322 = vmatpush2.msra.mxu0 0.0
        %1323 = vmatprep.subr.mxu0 0.0
        %1324 = vmatpush2.msra.mxu0 0.0
        %1325 = vmatprep.subr.mxu0 0.0
        %1326 = vmatpush2.msra.mxu0 0.0
        %1327 = vmatprep.subr.mxu0 0.0
        %1328 = vmatpush2.msra.mxu0 0.0
        %1329 = vmatprep.subr.mxu0 0.0
        %1330 = vmatpush2.msra.mxu0 0.0
        %1331 = vmatprep.subr.mxu0 0.0
        %1332 = vmatpush2.msra.mxu0 0.0
        %1333 = vmatprep.subr.mxu0 0.0
        %1334 = vmatpush2.msra.mxu0 0.0
        %1335 = vmatprep.subr.mxu0 0.0
        %1336 = vmatpush2.msra.mxu0 0.0
        %1337 = vmatprep.mubr.f32.mxu0 0.0
        %1338 = vmatmul.mubr.f32.gmra.mxu0 %v1201
        %v1339 = vpop.f32.mrf.mxu0
        %v1340 = vadd.f32 %v1270, %v1339
        %v1341 = vpop.f32.mrf.mxu0
        %1342 = vdwg.mxu0
        %v1344 = vrot.slane %v1130, 1
        %v1346 = vadd.f32 %v1340, %v1344
        %v1347 = vmax.f32 %v1346, 0.0
        %v1348 = vrot.slane %v1130, 2
        %1350 = vmatprep.subr.mxu0 0.0
        %1351 = vmatpush1.msra.mxu0 %v1128
        %1352 = vmatprep.subr.mxu0 0.0
        %1353 = vmatpush1.msra.mxu0 %v1127
        %1354 = vmatprep.subr.mxu0 0.0
        %1355 = vmatpush1.msra.mxu0 %v1126
        %1356 = vmatprep.subr.mxu0 0.0
        %1357 = vmatpush1.msra.mxu0 %v1125
        %1358 = vmatprep.subr.mxu0 0.0
        %1359 = vmatpush1.msra.mxu0 %v1124
        %1360 = vmatprep.subr.mxu0 0.0
        %1361 = vmatpush1.msra.mxu0 %v1123
        %1362 = vmatprep.subr.mxu0 0.0
        %1363 = vmatpush1.msra.mxu0 %v1122
        %1364 = vmatprep.subr.mxu0 0.0
        %1365 = vmatpush1.msra.mxu0 %v1121
        %1366 = vmatprep.subr.mxu0 0.0
        %1367 = vmatpush1.msra.mxu0 %v1120
        %1368 = vmatprep.subr.mxu0 0.0
        %1369 = vmatpush1.msra.mxu0 %v1119
        %1370 = vmatprep.subr.mxu0 0.0
        %1371 = vmatpush1.msra.mxu0 %v1118
        %1372 = vmatprep.subr.mxu0 0.0
        %1373 = vmatpush1.msra.mxu0 %v1117
        %1374 = vmatprep.subr.mxu0 0.0
        %1375 = vmatpush1.msra.mxu0 %v1116
        %1376 = vmatprep.subr.mxu0 0.0
        %1377 = vmatpush1.msra.mxu0 %v1115
        %1378 = vmatprep.subr.mxu0 0.0
        %1379 = vmatpush1.msra.mxu0 %v1114
        %1380 = vmatprep.subr.mxu0 0.0
        %1381 = vmatpush1.msra.mxu0 %v1113
        %1382 = vmatprep.subr.mxu0 0.0
        %1383 = vmatpush2.msra.mxu0 0.0
        %1384 = vmatprep.subr.mxu0 0.0
        %1385 = vmatpush2.msra.mxu0 0.0
        %1386 = vmatprep.subr.mxu0 0.0
        %1387 = vmatpush2.msra.mxu0 0.0
        %1388 = vmatprep.subr.mxu0 0.0
        %1389 = vmatpush2.msra.mxu0 0.0
        %1390 = vmatprep.subr.mxu0 0.0
        %1391 = vmatpush2.msra.mxu0 0.0
        %1392 = vmatprep.subr.mxu0 0.0
        %1393 = vmatpush2.msra.mxu0 0.0
        %1394 = vmatprep.subr.mxu0 0.0
        %1395 = vmatpush2.msra.mxu0 0.0
        %1396 = vmatprep.subr.mxu0 0.0
        %1397 = vmatpush2.msra.mxu0 0.0
        %1398 = vmatprep.subr.mxu0 0.0
        %1399 = vmatpush2.msra.mxu0 0.0
        %1400 = vmatprep.subr.mxu0 0.0
        %1401 = vmatpush2.msra.mxu0 0.0
        %1402 = vmatprep.subr.mxu0 0.0
        %1403 = vmatpush2.msra.mxu0 0.0
        %1404 = vmatprep.subr.mxu0 0.0
        %1405 = vmatpush2.msra.mxu0 0.0
        %1406 = vmatprep.subr.mxu0 0.0
        %1407 = vmatpush2.msra.mxu0 0.0
        %1408 = vmatprep.subr.mxu0 0.0
        %1409 = vmatpush2.msra.mxu0 0.0
        %1410 = vmatprep.subr.mxu0 0.0
        %1411 = vmatpush2.msra.mxu0 0.0
        %1412 = vmatprep.subr.mxu0 0.0
        %1413 = vmatpush2.msra.mxu0 0.0
        %1414 = vmatprep.mubr.f32.mxu0 0.0
        %1415 = vmatmul.mubr.f32.gmra.mxu0 %v1347
        %v1416 = vpop.f32.mrf.mxu0
        %v1417 = vadd.f32 %v1348, %v1416
        %v1418 = vpop.f32.mrf.mxu0
        %1419 = vdwg.mxu0
        %v1420 = vxor.u32 %v1417, 2147483648
        %v1421 = vmul.f32 %v1420, 1.442695
        %v1422 = vpow.pop %v1421
        %v1423 = vadd.f32 %v1422, 1.0
        %v1424 = vrcp.pop %v1423
        %v1425 = vmul.f32 1.0, %v1424
        %v1426 = vmul.f32 %v1425, %v1202
        %v1427 = vadd.f32 %v1201, %v1426
        %v1428 = vrot.slane %v1130, 3
        %v1430 = vmul.f32 %v1427, %v1428
        %v1431 = vrot.slane %v1130, 4
        %v1433 = vadd.f32 %v1430, %v1431
        %1434 = vst [vmem:[%s316 + $0x2] sm:$0x1] %v1433
        %s1435 = scalar_lea.vmem [#allocation2], 384
        %v1436 = vld [vmem:[%s1435] sm:$0xff]
        %v1437 = vld [vmem:[%s1435 + $0x8] sm:$0xff]
        %v1438 = vld [vmem:[%s1435 + $0x10] sm:$0xff]
        %v1439 = vld [vmem:[%s1435 + $0x18] sm:$0xff]
        %v1440 = vld [vmem:[%s1435 + $0x20] sm:$0xff]
        %v1441 = vld [vmem:[%s1435 + $0x28] sm:$0xff]
        %v1442 = vld [vmem:[%s1435 + $0x30] sm:$0xff]
        %v1443 = vld [vmem:[%s1435 + $0x38] sm:$0xff]
        %v1444 = vld [vmem:[%s1435 + $0x40] sm:$0xff]
        %v1445 = vld [vmem:[%s1435 + $0x48] sm:$0xff]
        %v1446 = vld [vmem:[%s1435 + $0x50] sm:$0xff]
        %v1447 = vld [vmem:[%s1435 + $0x58] sm:$0xff]
        %v1448 = vld [vmem:[%s1435 + $0x60] sm:$0xff]
        %v1449 = vld [vmem:[%s1435 + $0x68] sm:$0xff]
        %v1450 = vld [vmem:[%s1435 + $0x70] sm:$0xff]
        %v1451 = vld [vmem:[%s1435 + $0x78] sm:$0xff]
        %s1452 = scalar_lea.vmem [#allocation4], 384
        %v1453 = vld [vmem:[%s1452] sm:$0xff]
        %v1454 = vld [vmem:[%s1452 + $0x8] sm:$0xff]
        %v1455 = vld [vmem:[%s1452 + $0x10] sm:$0xff]
        %v1456 = vld [vmem:[%s1452 + $0x18] sm:$0xff]
        %v1457 = vld [vmem:[%s1452 + $0x20] sm:$0xff]
        %v1458 = vld [vmem:[%s1452 + $0x28] sm:$0xff]
        %v1459 = vld [vmem:[%s1452 + $0x30] sm:$0xff]
        %v1460 = vld [vmem:[%s1452 + $0x38] sm:$0xff]
        %v1461 = vld [vmem:[%s1452 + $0x40] sm:$0xff]
        %v1462 = vld [vmem:[%s1452 + $0x48] sm:$0xff]
        %v1463 = vld [vmem:[%s1452 + $0x50] sm:$0xff]
        %v1464 = vld [vmem:[%s1452 + $0x58] sm:$0xff]
        %v1465 = vld [vmem:[%s1452 + $0x60] sm:$0xff]
        %v1466 = vld [vmem:[%s1452 + $0x68] sm:$0xff]
        %v1467 = vld [vmem:[%s1452 + $0x70] sm:$0xff]
        %v1468 = vld [vmem:[%s1452 + $0x78] sm:$0xff]
        %s1469 = scalar_lea.vmem [#allocation6], 384
        %v1470 = vld [vmem:[%s1469] sm:$0xff]
        %v1471 = vld [vmem:[%s1469 + $0x8] sm:$0xff]
        %v1472 = vld [vmem:[%s1469 + $0x10] sm:$0xff]
        %v1473 = vld [vmem:[%s1469 + $0x18] sm:$0xff]
        %v1474 = vld [vmem:[%s1469 + $0x20] sm:$0xff]
        %v1475 = vld [vmem:[%s1469 + $0x28] sm:$0xff]
        %v1476 = vld [vmem:[%s1469 + $0x30] sm:$0xff]
        %v1477 = vld [vmem:[%s1469 + $0x38] sm:$0xff]
        %v1478 = vld [vmem:[%s1469 + $0x40] sm:$0xff]
        %v1479 = vld [vmem:[%s1469 + $0x48] sm:$0xff]
        %v1480 = vld [vmem:[%s1469 + $0x50] sm:$0xff]
        %v1481 = vld [vmem:[%s1469 + $0x58] sm:$0xff]
        %v1482 = vld [vmem:[%s1469 + $0x60] sm:$0xff]
        %v1483 = vld [vmem:[%s1469 + $0x68] sm:$0xff]
        %v1484 = vld [vmem:[%s1469 + $0x70] sm:$0xff]
        %v1485 = vld [vmem:[%s1469 + $0x78] sm:$0xff]
        %s1486 = scalar_lea.vmem [#allocation7], 384
        %v1487 = vld [vmem:[%s1486] sm:$0xff]
        %v1488 = vld [vmem:[%s1486 + $0x8] sm:$0xff]
        %v1489 = vld [vmem:[%s1486 + $0x10] sm:$0xff]
        %v1490 = vld [vmem:[%s1486 + $0x18] sm:$0xff]
        %v1491 = vld [vmem:[%s1486 + $0x20] sm:$0xff]
        %v1492 = vld [vmem:[%s1486 + $0x28] sm:$0xff]
        %v1493 = vld [vmem:[%s1486 + $0x30] sm:$0xff]
        %v1494 = vld [vmem:[%s1486 + $0x38] sm:$0xff]
        %v1495 = vld [vmem:[%s1486 + $0x40] sm:$0xff]
        %v1496 = vld [vmem:[%s1486 + $0x48] sm:$0xff]
        %v1497 = vld [vmem:[%s1486 + $0x50] sm:$0xff]
        %v1498 = vld [vmem:[%s1486 + $0x58] sm:$0xff]
        %v1499 = vld [vmem:[%s1486 + $0x60] sm:$0xff]
        %v1500 = vld [vmem:[%s1486 + $0x68] sm:$0xff]
        %v1501 = vld [vmem:[%s1486 + $0x70] sm:$0xff]
        %v1502 = vld [vmem:[%s1486 + $0x78] sm:$0xff]
        %s1503 = scalar_lea.vmem [#allocation9], 24
        %v1504 = vld [vmem:[%s1503] sm:$0xff]
        %1505 = vmatprep.subr.mxu0 0.0
        %1506 = vmatpush1.msra.mxu0 %v1451
        %1507 = vmatprep.subr.mxu0 0.0
        %1508 = vmatpush1.msra.mxu0 %v1450
        %1509 = vmatprep.subr.mxu0 0.0
        %1510 = vmatpush1.msra.mxu0 %v1449
        %1511 = vmatprep.subr.mxu0 0.0
        %1512 = vmatpush1.msra.mxu0 %v1448
        %1513 = vmatprep.subr.mxu0 0.0
        %1514 = vmatpush1.msra.mxu0 %v1447
        %1515 = vmatprep.subr.mxu0 0.0
        %1516 = vmatpush1.msra.mxu0 %v1446
        %1517 = vmatprep.subr.mxu0 0.0
        %1518 = vmatpush1.msra.mxu0 %v1445
        %1519 = vmatprep.subr.mxu0 0.0
        %1520 = vmatpush1.msra.mxu0 %v1444
        %1521 = vmatprep.subr.mxu0 0.0
        %1522 = vmatpush1.msra.mxu0 %v1443
        %1523 = vmatprep.subr.mxu0 0.0
        %1524 = vmatpush1.msra.mxu0 %v1442
        %1525 = vmatprep.subr.mxu0 0.0
        %1526 = vmatpush1.msra.mxu0 %v1441
        %1527 = vmatprep.subr.mxu0 0.0
        %1528 = vmatpush1.msra.mxu0 %v1440
        %1529 = vmatprep.subr.mxu0 0.0
        %1530 = vmatpush1.msra.mxu0 %v1439
        %1531 = vmatprep.subr.mxu0 0.0
        %1532 = vmatpush1.msra.mxu0 %v1438
        %1533 = vmatprep.subr.mxu0 0.0
        %1534 = vmatpush1.msra.mxu0 %v1437
        %1535 = vmatprep.subr.mxu0 0.0
        %1536 = vmatpush1.msra.mxu0 %v1436
        %1537 = vmatprep.subr.mxu0 0.0
        %1538 = vmatpush2.msra.mxu0 0.0
        %1539 = vmatprep.subr.mxu0 0.0
        %1540 = vmatpush2.msra.mxu0 0.0
        %1541 = vmatprep.subr.mxu0 0.0
        %1542 = vmatpush2.msra.mxu0 0.0
        %1543 = vmatprep.subr.mxu0 0.0
        %1544 = vmatpush2.msra.mxu0 0.0
        %1545 = vmatprep.subr.mxu0 0.0
        %1546 = vmatpush2.msra.mxu0 0.0
        %1547 = vmatprep.subr.mxu0 0.0
        %1548 = vmatpush2.msra.mxu0 0.0
        %1549 = vmatprep.subr.mxu0 0.0
        %1550 = vmatpush2.msra.mxu0 0.0
        %1551 = vmatprep.subr.mxu0 0.0
        %1552 = vmatpush2.msra.mxu0 0.0
        %1553 = vmatprep.subr.mxu0 0.0
        %1554 = vmatpush2.msra.mxu0 0.0
        %1555 = vmatprep.subr.mxu0 0.0
        %1556 = vmatpush2.msra.mxu0 0.0
        %1557 = vmatprep.subr.mxu0 0.0
        %1558 = vmatpush2.msra.mxu0 0.0
        %1559 = vmatprep.subr.mxu0 0.0
        %1560 = vmatpush2.msra.mxu0 0.0
        %1561 = vmatprep.subr.mxu0 0.0
        %1562 = vmatpush2.msra.mxu0 0.0
        %1563 = vmatprep.subr.mxu0 0.0
        %1564 = vmatpush2.msra.mxu0 0.0
        %1565 = vmatprep.subr.mxu0 0.0
        %1566 = vmatpush2.msra.mxu0 0.0
        %1567 = vmatprep.subr.mxu0 0.0
        %1568 = vmatpush2.msra.mxu0 0.0
        %1569 = vmatprep.mubr.f32.mxu0 0.0
        %1570 = vmatmul.mubr.f32.gmra.mxu0 %v1433
        %v1571 = vpop.f32.mrf.mxu0
        %v1572 = vadd.f32 %v1504, %v1571
        %v1573 = vpop.f32.mrf.mxu0
        %1574 = vdwg.mxu0
        %v1575 = vmax.f32 %v1572, 0.0
        %v1576 = vmin.f32 %v1572, 0.0
        %1577 = vmatprep.subr.mxu0 0.0
        %1578 = vmatpush1.msra.mxu0 %v1485
        %1579 = vmatprep.subr.mxu0 0.0
        %1580 = vmatpush1.msra.mxu0 %v1484
        %1581 = vmatprep.subr.mxu0 0.0
        %1582 = vmatpush1.msra.mxu0 %v1483
        %1583 = vmatprep.subr.mxu0 0.0
        %1584 = vmatpush1.msra.mxu0 %v1482
        %1585 = vmatprep.subr.mxu0 0.0
        %1586 = vmatpush1.msra.mxu0 %v1481
        %1587 = vmatprep.subr.mxu0 0.0
        %1588 = vmatpush1.msra.mxu0 %v1480
        %1589 = vmatprep.subr.mxu0 0.0
        %1590 = vmatpush1.msra.mxu0 %v1479
        %1591 = vmatprep.subr.mxu0 0.0
        %1592 = vmatpush1.msra.mxu0 %v1478
        %1593 = vmatprep.subr.mxu0 0.0
        %1594 = vmatpush1.msra.mxu0 %v1477
        %1595 = vmatprep.subr.mxu0 0.0
        %1596 = vmatpush1.msra.mxu0 %v1476
        %1597 = vmatprep.subr.mxu0 0.0
        %1598 = vmatpush1.msra.mxu0 %v1475
        %1599 = vmatprep.subr.mxu0 0.0
        %1600 = vmatpush1.msra.mxu0 %v1474
        %1601 = vmatprep.subr.mxu0 0.0
        %1602 = vmatpush1.msra.mxu0 %v1473
        %1603 = vmatprep.subr.mxu0 0.0
        %1604 = vmatpush1.msra.mxu0 %v1472
        %1605 = vmatprep.subr.mxu0 0.0
        %1606 = vmatpush1.msra.mxu0 %v1471
        %1607 = vmatprep.subr.mxu0 0.0
        %1608 = vmatpush1.msra.mxu0 %v1470
        %1609 = vmatprep.subr.mxu0 0.0
        %1610 = vmatpush2.msra.mxu0 0.0
        %1611 = vmatprep.subr.mxu0 0.0
        %1612 = vmatpush2.msra.mxu0 0.0
        %1613 = vmatprep.subr.mxu0 0.0
        %1614 = vmatpush2.msra.mxu0 0.0
        %1615 = vmatprep.subr.mxu0 0.0
        %1616 = vmatpush2.msra.mxu0 0.0
        %1617 = vmatprep.subr.mxu0 0.0
        %1618 = vmatpush2.msra.mxu0 0.0
        %1619 = vmatprep.subr.mxu0 0.0
        %1620 = vmatpush2.msra.mxu0 0.0
        %1621 = vmatprep.subr.mxu0 0.0
        %1622 = vmatpush2.msra.mxu0 0.0
        %1623 = vmatprep.subr.mxu0 0.0
        %1624 = vmatpush2.msra.mxu0 0.0
        %1625 = vmatprep.subr.mxu0 0.0
        %1626 = vmatpush2.msra.mxu0 0.0
        %1627 = vmatprep.subr.mxu0 0.0
        %1628 = vmatpush2.msra.mxu0 0.0
        %1629 = vmatprep.subr.mxu0 0.0
        %1630 = vmatpush2.msra.mxu0 0.0
        %1631 = vmatprep.subr.mxu0 0.0
        %1632 = vmatpush2.msra.mxu0 0.0
        %1633 = vmatprep.subr.mxu0 0.0
        %1634 = vmatpush2.msra.mxu0 0.0
        %1635 = vmatprep.subr.mxu0 0.0
        %1636 = vmatpush2.msra.mxu0 0.0
        %1637 = vmatprep.subr.mxu0 0.0
        %1638 = vmatpush2.msra.mxu0 0.0
        %1639 = vmatprep.subr.mxu0 0.0
        %1640 = vmatpush2.msra.mxu0 0.0
        %1641 = vmatprep.mubr.f32.mxu0 0.0
        %1642 = vmatmul.mubr.f32.gmra.mxu0 %v1576
        %v1643 = vpop.f32.mrf.mxu0
        %v1644 = vadd.f32 0.0, %v1643
        %v1645 = vpop.f32.mrf.mxu0
        %1646 = vdwg.mxu0
        %1647 = vmatprep.subr.mxu0 0.0
        %1648 = vmatpush1.msra.mxu0 %v1468
        %1649 = vmatprep.subr.mxu0 0.0
        %1650 = vmatpush1.msra.mxu0 %v1467
        %1651 = vmatprep.subr.mxu0 0.0
        %1652 = vmatpush1.msra.mxu0 %v1466
        %1653 = vmatprep.subr.mxu0 0.0
        %1654 = vmatpush1.msra.mxu0 %v1465
        %1655 = vmatprep.subr.mxu0 0.0
        %1656 = vmatpush1.msra.mxu0 %v1464
        %1657 = vmatprep.subr.mxu0 0.0
        %1658 = vmatpush1.msra.mxu0 %v1463
        %1659 = vmatprep.subr.mxu0 0.0
        %1660 = vmatpush1.msra.mxu0 %v1462
        %1661 = vmatprep.subr.mxu0 0.0
        %1662 = vmatpush1.msra.mxu0 %v1461
        %1663 = vmatprep.subr.mxu0 0.0
        %1664 = vmatpush1.msra.mxu0 %v1460
        %1665 = vmatprep.subr.mxu0 0.0
        %1666 = vmatpush1.msra.mxu0 %v1459
        %1667 = vmatprep.subr.mxu0 0.0
        %1668 = vmatpush1.msra.mxu0 %v1458
        %1669 = vmatprep.subr.mxu0 0.0
        %1670 = vmatpush1.msra.mxu0 %v1457
        %1671 = vmatprep.subr.mxu0 0.0
        %1672 = vmatpush1.msra.mxu0 %v1456
        %1673 = vmatprep.subr.mxu0 0.0
        %1674 = vmatpush1.msra.mxu0 %v1455
        %1675 = vmatprep.subr.mxu0 0.0
        %1676 = vmatpush1.msra.mxu0 %v1454
        %1677 = vmatprep.subr.mxu0 0.0
        %1678 = vmatpush1.msra.mxu0 %v1453
        %1679 = vmatprep.subr.mxu0 0.0
        %1680 = vmatpush2.msra.mxu0 0.0
        %1681 = vmatprep.subr.mxu0 0.0
        %1682 = vmatpush2.msra.mxu0 0.0
        %1683 = vmatprep.subr.mxu0 0.0
        %1684 = vmatpush2.msra.mxu0 0.0
        %1685 = vmatprep.subr.mxu0 0.0
        %1686 = vmatpush2.msra.mxu0 0.0
        %1687 = vmatprep.subr.mxu0 0.0
        %1688 = vmatpush2.msra.mxu0 0.0
        %1689 = vmatprep.subr.mxu0 0.0
        %1690 = vmatpush2.msra.mxu0 0.0
        %1691 = vmatprep.subr.mxu0 0.0
        %1692 = vmatpush2.msra.mxu0 0.0
        %1693 = vmatprep.subr.mxu0 0.0
        %1694 = vmatpush2.msra.mxu0 0.0
        %1695 = vmatprep.subr.mxu0 0.0
        %1696 = vmatpush2.msra.mxu0 0.0
        %1697 = vmatprep.subr.mxu0 0.0
        %1698 = vmatpush2.msra.mxu0 0.0
        %1699 = vmatprep.subr.mxu0 0.0
        %1700 = vmatpush2.msra.mxu0 0.0
        %1701 = vmatprep.subr.mxu0 0.0
        %1702 = vmatpush2.msra.mxu0 0.0
        %1703 = vmatprep.subr.mxu0 0.0
        %1704 = vmatpush2.msra.mxu0 0.0
        %1705 = vmatprep.subr.mxu0 0.0
        %1706 = vmatpush2.msra.mxu0 0.0
        %1707 = vmatprep.subr.mxu0 0.0
        %1708 = vmatpush2.msra.mxu0 0.0
        %1709 = vmatprep.subr.mxu0 0.0
        %1710 = vmatpush2.msra.mxu0 0.0
        %1711 = vmatprep.mubr.f32.mxu0 0.0
        %1712 = vmatmul.mubr.f32.gmra.mxu0 %v1575
        %v1713 = vpop.f32.mrf.mxu0
        %v1714 = vadd.f32 %v1644, %v1713
        %v1715 = vpop.f32.mrf.mxu0
        %1716 = vdwg.mxu0
        %v1718 = vrot.slane %v1504, 1
        %v1720 = vadd.f32 %v1714, %v1718
        %v1721 = vmax.f32 %v1720, 0.0
        %v1722 = vrot.slane %v1504, 2
        %1724 = vmatprep.subr.mxu0 0.0
        %1725 = vmatpush1.msra.mxu0 %v1502
        %1726 = vmatprep.subr.mxu0 0.0
        %1727 = vmatpush1.msra.mxu0 %v1501
        %1728 = vmatprep.subr.mxu0 0.0
        %1729 = vmatpush1.msra.mxu0 %v1500
        %1730 = vmatprep.subr.mxu0 0.0
        %1731 = vmatpush1.msra.mxu0 %v1499
        %1732 = vmatprep.subr.mxu0 0.0
        %1733 = vmatpush1.msra.mxu0 %v1498
        %1734 = vmatprep.subr.mxu0 0.0
        %1735 = vmatpush1.msra.mxu0 %v1497
        %1736 = vmatprep.subr.mxu0 0.0
        %1737 = vmatpush1.msra.mxu0 %v1496
        %1738 = vmatprep.subr.mxu0 0.0
        %1739 = vmatpush1.msra.mxu0 %v1495
        %1740 = vmatprep.subr.mxu0 0.0
        %1741 = vmatpush1.msra.mxu0 %v1494
        %1742 = vmatprep.subr.mxu0 0.0
        %1743 = vmatpush1.msra.mxu0 %v1493
        %1744 = vmatprep.subr.mxu0 0.0
        %1745 = vmatpush1.msra.mxu0 %v1492
        %1746 = vmatprep.subr.mxu0 0.0
        %1747 = vmatpush1.msra.mxu0 %v1491
        %1748 = vmatprep.subr.mxu0 0.0
        %1749 = vmatpush1.msra.mxu0 %v1490
        %1750 = vmatprep.subr.mxu0 0.0
        %1751 = vmatpush1.msra.mxu0 %v1489
        %1752 = vmatprep.subr.mxu0 0.0
        %1753 = vmatpush1.msra.mxu0 %v1488
        %1754 = vmatprep.subr.mxu0 0.0
        %1755 = vmatpush1.msra.mxu0 %v1487
        %1756 = vmatprep.subr.mxu0 0.0
        %1757 = vmatpush2.msra.mxu0 0.0
        %1758 = vmatprep.subr.mxu0 0.0
        %1759 = vmatpush2.msra.mxu0 0.0
        %1760 = vmatprep.subr.mxu0 0.0
        %1761 = vmatpush2.msra.mxu0 0.0
        %1762 = vmatprep.subr.mxu0 0.0
        %1763 = vmatpush2.msra.mxu0 0.0
        %1764 = vmatprep.subr.mxu0 0.0
        %1765 = vmatpush2.msra.mxu0 0.0
        %1766 = vmatprep.subr.mxu0 0.0
        %1767 = vmatpush2.msra.mxu0 0.0
        %1768 = vmatprep.subr.mxu0 0.0
        %1769 = vmatpush2.msra.mxu0 0.0
        %1770 = vmatprep.subr.mxu0 0.0
        %1771 = vmatpush2.msra.mxu0 0.0
        %1772 = vmatprep.subr.mxu0 0.0
        %1773 = vmatpush2.msra.mxu0 0.0
        %1774 = vmatprep.subr.mxu0 0.0
        %1775 = vmatpush2.msra.mxu0 0.0
        %1776 = vmatprep.subr.mxu0 0.0
        %1777 = vmatpush2.msra.mxu0 0.0
        %1778 = vmatprep.subr.mxu0 0.0
        %1779 = vmatpush2.msra.mxu0 0.0
        %1780 = vmatprep.subr.mxu0 0.0
        %1781 = vmatpush2.msra.mxu0 0.0
        %1782 = vmatprep.subr.mxu0 0.0
        %1783 = vmatpush2.msra.mxu0 0.0
        %1784 = vmatprep.subr.mxu0 0.0
        %1785 = vmatpush2.msra.mxu0 0.0
        %1786 = vmatprep.subr.mxu0 0.0
        %1787 = vmatpush2.msra.mxu0 0.0
        %1788 = vmatprep.mubr.f32.mxu0 0.0
        %1789 = vmatmul.mubr.f32.gmra.mxu0 %v1721
        %v1790 = vpop.f32.mrf.mxu0
        %v1791 = vadd.f32 %v1722, %v1790
        %v1792 = vpop.f32.mrf.mxu0
        %1793 = vdwg.mxu0
        %v1794 = vxor.u32 %v1791, 2147483648
        %v1795 = vmul.f32 %v1794, 1.442695
        %v1796 = vpow.pop %v1795
        %v1797 = vadd.f32 %v1796, 1.0
        %v1798 = vrcp.pop %v1797
        %v1799 = vmul.f32 1.0, %v1798
        %v1800 = vmul.f32 %v1799, %v1576
        %v1801 = vadd.f32 %v1575, %v1800
        %v1802 = vrot.slane %v1504, 3
        %v1804 = vmul.f32 %v1801, %v1802
        %v1805 = vrot.slane %v1504, 4
        %v1807 = vadd.f32 %v1804, %v1805
        %1808 = vst [vmem:[%s316 + $0x3] sm:$0x1] %v1807
        %p1809 = scmp.lt.s32.totalorder %s20, 1
        %s1810 = scalar_select %p1809, %s20, 1
        %s1811 = smul.addr %s1810, 4
        %s1812 = scalar_lea.vmem %s6, %s1811
        // Predicated region
        $region65: #{denoise_enc.1} parent=43 // pred_check
          %p1813 = pneg %p169
        $region66: #{denoise_enc.1} parent=43 // pred_check_branch
          %1815 = sbr.rel (%p1813) target = $region68
        $region67: #{denoise_enc.1} parent=43 // pred_region
          _
        $region68: #{denoise_enc.1} parent=43 // pred_fallthru
          _
      $region44: #{denoise_enc.1} parent=5 // pred_fallthru
        _
      %p1816 = scmp.le.s32.totalorder 2, %s15
      // Predicated region
      $region69: #{denoise_enc.1} parent=5 // pred_check
        %p1817 = pneg %p1816
      $region70: #{denoise_enc.1} parent=5 // pred_check_branch
        %1819 = sbr.rel (%p1817) target = $region72
      $region71: #{denoise_enc.1} parent=5 // pred_region
        %s1820 = ssub.s32 %s15, 2
        // Predicated region
        $region73: #{denoise_enc.1} parent=71 // pred_check
          %p1821 = pneg %p175
        $region74: #{denoise_enc.1} parent=71 // pred_check_branch
          %1823 = sbr.rel (%p1821) target = $region76
        $region75: #{denoise_enc.1} parent=71 // pred_region
          %p1824 = scmp.lt.s32.totalorder %s21, 1
          %s1825 = scalar_select %p1824, %s21, 1
          %s1826 = smul.addr %s1825, 4
          %s1827 = scalar_lea.vmem %s6, %s1826
        $region76: #{denoise_enc.1} parent=71 // pred_fallthru
          _
      $region72: #{denoise_enc.1} parent=5 // pred_fallthru
        _
    $region6: #{denoise_enc.1} parent=1 // loop_footer
      %s19 = sadd.s32 1, %s15
    $region7: #{denoise_enc.1} parent=1 // loop_footer_branch
      %14 = sbr.rel target = $region3
    $region8: #{denoise_enc.1} parent=1 // loop_exit
      _
    %1828 = vsyncpa [#allocation3], 1
    %s1829 = scalar_lea.sflag [#allocation3], 1
    %1830 = vsyncpa %s1829, 1
    %1831 = vsyncpa [#allocation5], 1
    %1832 = vsyncpa [#allocation8], 1

</llo_original>
